<compile_context>
chip_gen: v7x
topology: tpu7x:2x2x1
jax: 0.10.0
libtpu: 0.0.40
codegen_flags: <defaults>
</compile_context>

<pallas_src>
import functools

import jax
import jax.numpy as jnp
from jax.experimental import pallas as pl
from jax.experimental.pallas import tpu as pltpu


def _round_up(v, m):
    return ((v + m - 1) // m) * m


def mamba_kernel(x_ref, wx_ref, wres_ref, cw_ref, cb_ref, wb_ref, wc_ref,
                 a_ref, d_ref, wout_ref, o_ref, b_sc, st_sc,
                 *, b_tile, seq_len, mxu_dtype):
    n_rows = b_tile * seq_len                 # time-major rows: r = t*b_tile + b
    d_state = a_ref.shape[1]

    x = x_ref[...].astype(mxu_dtype)                       # MXU operand cast

    # ---- in_proj (no bias): two lane-aligned row-slab dots ------------------
    x_main = jnp.dot(x, wx_ref[...], preferred_element_type=jnp.float32)
    res = jnp.dot(x, wres_ref[...], preferred_element_type=jnp.float32)

    # ---- depthwise conv1d (kernel=3, padding=1) along the time axis ----------
    # One timestep == b_tile sublanes; pltpu.roll shifts on the XLU and an iota
    # mask zeroes the wrapped boundary rows.
    row = jax.lax.broadcasted_iota(jnp.int32, (n_rows, 1), 0)
    prev = jnp.where(row < b_tile, 0.0,
                     pltpu.roll(x_main, shift=b_tile, axis=0))
    nxt = jnp.where(row >= n_rows - b_tile, 0.0,
                    pltpu.roll(x_main, shift=n_rows - b_tile, axis=0))
    x_conv = (prev * cw_ref[0:1, :] + x_main * cw_ref[1:2, :]
              + nxt * cw_ref[2:3, :] + cb_ref[...])
    x_conv = x_conv * jax.nn.sigmoid(x_conv)                # SiLU (f32 VPU/EUP)

    # ---- B / C projections ----------------------------------------------------
    xc = x_conv.astype(mxu_dtype)
    b_sc[...] = jnp.dot(xc, wb_ref[...], preferred_element_type=jnp.float32)
    c_all = jnp.dot(xc, wc_ref[...], preferred_element_type=jnp.float32)

    # ---- selective scan: state (b_tile, d_state), batch on sublanes -----------
    expA = jnp.broadcast_to(jnp.exp(-jax.nn.softplus(a_ref[...])),
                            (b_tile, d_state))              # hoisted out of loop

    def scan_body(t, state):
        r0 = pl.multiple_of(t * b_tile, b_tile)              # 8-aligned slab
        state = state * expA + b_sc[pl.ds(r0, b_tile), :]    # state_0 = B_0
        st_sc[pl.ds(r0, b_tile), :] = state
        return state

    jax.lax.fori_loop(0, seq_len, scan_body,
                      jnp.zeros((b_tile, d_state), jnp.float32),
                      unroll=min(seq_len, 8))

    # y_scan[n] = sum_k state[n, k] * C[n, k]  (vectorized after the loop)
    y_scan = jnp.sum(st_sc[...] * c_all, axis=-1, keepdims=True)

    # ---- skip term, gate, out_proj --------------------------------------------
    y = y_scan + x_conv * d_ref[...]
    y = y * (res * jax.nn.sigmoid(res))
    o_ref[...] = jnp.dot(y.astype(mxu_dtype), wout_ref[...],
                         preferred_element_type=jnp.float32)


def mamba_layer(x, params, *, b_tile=None, mxu_dtype=jnp.bfloat16):
    Bsz, L, d_model = x.shape
    W_in, cw, cb, W_B, W_C, A, D, W_out = params
    d_inner = D.shape[1]
    d_state = A.shape[1]

    # Split in_proj so the kernel never lane-slices a non-128-aligned column.
    W_x, W_res = W_in[:, :d_inner], W_in[:, d_inner:]

    # Lane-dense output writeback / in_proj K dim: zero-pad d_model to 128.
    d_model_p = _round_up(d_model, 128)
    if d_model_p != d_model:
        pad = d_model_p - d_model
        x = jnp.pad(x, ((0, 0), (0, 0), (0, pad)))
        W_x = jnp.pad(W_x, ((0, pad), (0, 0)))
        W_res = jnp.pad(W_res, ((0, pad), (0, 0)))
        W_out = jnp.pad(W_out, ((0, 0), (0, pad)))

    # Batch tile: multiple of 8 (aligned scan stores), >=256 rows per grid step
    # for the 256-wide v6e/v7x MXUs, and >=2 grid steps when the batch allows
    # it so the "parallel" axis can shard across both v7x TensorCores.
    b_pad8 = _round_up(Bsz, 8)
    if b_tile is None:
        b_tile = min(_round_up(max(1, pl.cdiv(256, L)), 8), b_pad8)
        if b_pad8 // b_tile < 2 and b_pad8 >= 16:
            b_tile = _round_up(pl.cdiv(b_pad8, 2), 8)
        b_tile = max(8, b_tile)
    else:
        b_tile = _round_up(b_tile, 8)
    n_tiles = pl.cdiv(Bsz, b_tile)
    Bp = n_tiles * b_tile
    if Bp != Bsz:
        x = jnp.pad(x, ((0, Bp - Bsz), (0, 0), (0, 0)))

    # Time-major rows within each tile (row = t*b_tile + b): contiguous,
    # sublane-aligned scan slabs. Wrapper-side layout plumbing only.
    x_tm = (x.reshape(n_tiles, b_tile, L, d_model_p)
              .transpose(0, 2, 1, 3)
              .reshape(n_tiles * L * b_tile, d_model_p))
    rows = L * b_tile

    # MXU operands go to the kernel in bf16; elementwise params stay f32.
    W_x_k, W_res_k = W_x.astype(mxu_dtype), W_res.astype(mxu_dtype)
    W_B_k, W_C_k = W_B.astype(mxu_dtype), W_C.astype(mxu_dtype)
    W_out_k = W_out.astype(mxu_dtype)

    itemsize = jnp.dtype(mxu_dtype).itemsize
    weight_bytes = ((2 * d_model_p * d_inner + 2 * d_inner * d_state
                     + d_inner * d_model_p) * itemsize
                    + (5 * d_inner + d_state) * 4)
    io_bytes = 2 * rows * d_model_p * 4 * 2          # x + out, double-buffered
    scratch_bytes = 2 * rows * d_state * 4
    vmem_limit = int(min(64 << 20,
                         max(16 << 20,
                             2 * weight_bytes + io_bytes + scratch_bytes
                             + (2 << 20))))

    kernel = functools.partial(mamba_kernel, b_tile=b_tile, seq_len=L,
                               mxu_dtype=mxu_dtype)

    def _call(weight_mode):
        if weight_mode is None:
            def wspec(shape):
                return pl.BlockSpec(shape, lambda g: (0, 0))
        else:
            def wspec(shape):
                return pl.BlockSpec(shape, lambda g: (0, 0),
                                    pipeline_mode=weight_mode)
        return pl.pallas_call(
            kernel,
            out_shape=jax.ShapeDtypeStruct((n_tiles * rows, d_model_p),
                                           jnp.float32),
            grid=(n_tiles,),
            in_specs=[
                pl.BlockSpec((rows, d_model_p), lambda g: (g, 0)),   # x (rows)
                wspec((d_model_p, d_inner)),                         # W_x
                wspec((d_model_p, d_inner)),                         # W_res
                wspec((3, d_inner)),                                 # conv w
                wspec((1, d_inner)),                                 # conv b
                wspec((d_inner, d_state)),                           # W_B
                wspec((d_inner, d_state)),                           # W_C
                wspec((1, d_state)),                                 # A
                wspec((1, d_inner)),                                 # D
                wspec((d_inner, d_model_p)),                         # W_out
            ],
            out_specs=pl.BlockSpec((rows, d_model_p), lambda g: (g, 0)),
            scratch_shapes=[
                pltpu.VMEM((rows, d_state), jnp.float32),   # B projection
                pltpu.VMEM((rows, d_state), jnp.float32),   # scan states
            ],
            compiler_params=pltpu.CompilerParams(
                dimension_semantics=("parallel",),
                vmem_limit_bytes=vmem_limit),
        )(x_tm, W_x_k, W_res_k, cw, cb, W_B_k, W_C_k, A, D, W_out_k)

    try:
        # Grid-invariant weights: single-buffer (constant index_map -> no need
        # to burn VMEM on a second buffer).
        out_tm = _call(pl.Buffered(1))
    except Exception:  # pragma: no cover - jax without buffer_count=1 support
        out_tm = _call(None)

    out = (out_tm.reshape(n_tiles, L, b_tile, d_model_p)
                 .transpose(0, 2, 1, 3)
                 .reshape(Bp, L, d_model_p))
    return out[:Bsz, :, :d_model]


def mamba_reference(x, params, mxu_dtype=jnp.float32):
    """Pure-JAX reference mirroring the PyTorch forward exactly.

    `mxu_dtype` mirrors the kernel's matmul-operand precision (everything
    elementwise stays f32), so the comparison stays tight with bf16 operands.
    """
    W_in, cw, cb, W_B, W_C, A, D, W_out = params
    d_inner = D.shape[1]
    m = lambda a: a.astype(mxu_dtype)

    xr = jnp.dot(m(x), m(W_in), preferred_element_type=jnp.float32)
    x_main, res = xr[..., :d_inner], xr[..., d_inner:]
    xp = jnp.pad(x_main, ((0, 0), (1, 1), (0, 0)))
    x_conv = (xp[:, :-2] * cw[0] + xp[:, 1:-1] * cw[1] + xp[:, 2:] * cw[2] + cb)
    x_conv = x_conv * jax.nn.sigmoid(x_conv)
    Bm = jnp.dot(m(x_conv), m(W_B), preferred_element_type=jnp.float32)
    Cm = jnp.dot(m(x_conv), m(W_C), preferred_element_type=jnp.float32)
    expA = jnp.exp(-jax.nn.softplus(A[0]))

    def step(state, inp):
        b_t, c_t = inp
        state = state * expA + b_t
        return state, jnp.sum(state * c_t, axis=-1)

    state0 = jnp.zeros((x.shape[0], A.shape[1]), jnp.float32)
    _, outs = jax.lax.scan(step, state0,
                           (jnp.swapaxes(Bm, 0, 1), jnp.swapaxes(Cm, 0, 1)))
    y_scan = jnp.swapaxes(outs, 0, 1)[..., None]
    y = y_scan + x_conv * D
    y = y * (res * jax.nn.sigmoid(res))
    return jnp.dot(m(y), m(W_out), preferred_element_type=jnp.float32)


if __name__ == "__main__":
    batch, seq, d_model = 2, 8, 32
    d_state, expand = 16, 2
    d_inner = expand * d_model

    key = jax.random.PRNGKey(0)
    ks = jax.random.split(key, 8)
    W_in = jax.random.normal(ks[0], (d_model, 2 * d_inner), jnp.float32) * 0.1
    cw = jax.random.normal(ks[1], (3, d_inner), jnp.float32) * 0.3   # (k, ch)
    cb = jax.random.normal(ks[2], (1, d_inner), jnp.float32) * 0.1
    W_B = jax.random.normal(ks[3], (d_inner, d_state), jnp.float32) * 0.1
    W_C = jax.random.normal(ks[4], (d_inner, d_state), jnp.float32) * 0.1
    A = jax.random.normal(ks[5], (1, d_state), jnp.float32)
    D = jnp.ones((1, d_inner), jnp.float32)
    W_out = jax.random.normal(ks[6], (d_inner, d_model), jnp.float32) * 0.1
    params = (W_in, cw, cb, W_B, W_C, A, D, W_out)

    x = jax.random.normal(ks[7], (batch, seq, d_model), jnp.float32)

    out = jax.block_until_ready(mamba_layer(x, params))
    # Reference mirrors the kernel's bf16 MXU-operand precision (f32 elsewhere)
    # so the check stays tight; the tolerance-loosening vs a pure-f32 reference
    # is the expected consequence of the bf16 matmul operands.
    ref = jax.block_until_ready(mamba_reference(x, params,
                                                mxu_dtype=jnp.bfloat16))

    assert out.shape == (batch, seq, d_model)
    assert jnp.allclose(out, ref, rtol=2e-3, atol=2e-3), "mismatch vs reference"
    print("KERNEL_OK")
</pallas_src>

<mosaic_0001>
module attributes {stable_mosaic.version = 11 : i64} {
  func.func @mamba_kernel(%arg0: i32, %arg1: memref<64x128xf32, #tpu.memory_space<vmem>>, %arg2: memref<128x64xbf16, #tpu.memory_space<vmem>>, %arg3: memref<128x64xbf16, #tpu.memory_space<vmem>>, %arg4: memref<3x64xf32, #tpu.memory_space<vmem>>, %arg5: memref<1x64xf32, #tpu.memory_space<vmem>>, %arg6: memref<64x16xbf16, #tpu.memory_space<vmem>>, %arg7: memref<64x16xbf16, #tpu.memory_space<vmem>>, %arg8: memref<1x16xf32, #tpu.memory_space<vmem>>, %arg9: memref<1x64xf32, #tpu.memory_space<vmem>>, %arg10: memref<64x128xbf16, #tpu.memory_space<vmem>>, %arg11: memref<64x128xf32, #tpu.memory_space<vmem>>, %arg12: memref<64x16xf32, #tpu.memory_space<vmem>>, %arg13: memref<64x16xf32, #tpu.memory_space<vmem>>) attributes {dimension_semantics = [#tpu.dimension_semantics<parallel>], iteration_bounds = array<i64: 1>, scalar_prefetch = 0 : i64, scratch_operands = 2 : i64, tpu.core_type = #tpu.core_type<tc>, window_params = [{transform_indices = @transform_0, window_bounds = array<i64: 64, 128>}, {pipeline_mode = #tpu.pipeline_mode<synchronous>, transform_indices = @transform_1, window_bounds = array<i64: 128, 64>}, {pipeline_mode = #tpu.pipeline_mode<synchronous>, transform_indices = @transform_2, window_bounds = array<i64: 128, 64>}, {pipeline_mode = #tpu.pipeline_mode<synchronous>, transform_indices = @transform_3, window_bounds = array<i64: 3, 64>}, {pipeline_mode = #tpu.pipeline_mode<synchronous>, transform_indices = @transform_4, window_bounds = array<i64: 1, 64>}, {pipeline_mode = #tpu.pipeline_mode<synchronous>, transform_indices = @transform_5, window_bounds = array<i64: 64, 16>}, {pipeline_mode = #tpu.pipeline_mode<synchronous>, transform_indices = @transform_6, window_bounds = array<i64: 64, 16>}, {pipeline_mode = #tpu.pipeline_mode<synchronous>, transform_indices = @transform_7, window_bounds = array<i64: 1, 16>}, {pipeline_mode = #tpu.pipeline_mode<synchronous>, transform_indices = @transform_8, window_bounds = array<i64: 1, 64>}, {pipeline_mode = #tpu.pipeline_mode<synchronous>, transform_indices = @transform_9, window_bounds = array<i64: 64, 128>}, {transform_indices = @transform_10, window_bounds = array<i64: 64, 128>}]} {
    %c0 = arith.constant 0 : index
    %c0_0 = arith.constant 0 : index
    %0 = vector.load %arg1[%c0, %c0_0] : memref<64x128xf32, #tpu.memory_space<vmem>>, vector<64x128xf32>
    %1 = arith.truncf %0 : vector<64x128xf32> to vector<64x128xbf16>
    %c0_1 = arith.constant 0 : index
    %c0_2 = arith.constant 0 : index
    %2 = vector.load %arg2[%c0_1, %c0_2] : memref<128x64xbf16, #tpu.memory_space<vmem>>, vector<128x64xbf16>
    %cst = arith.constant dense<0.000000e+00> : vector<64x64xf32>
    %3 = tpu.matmul %1, %2, %cst {dimension_numbers = #tpu.dot_dimension_numbers<[1], [0], [0], [1], [0, 0, 1, 1], [], []>} : vector<64x128xbf16>, vector<128x64xbf16>, vector<64x64xf32> -> vector<64x64xf32>
    %c0_3 = arith.constant 0 : index
    %c0_4 = arith.constant 0 : index
    %4 = vector.load %arg3[%c0_3, %c0_4] : memref<128x64xbf16, #tpu.memory_space<vmem>>, vector<128x64xbf16>
    %cst_5 = arith.constant dense<0.000000e+00> : vector<64x64xf32>
    %5 = tpu.matmul %1, %4, %cst_5 {dimension_numbers = #tpu.dot_dimension_numbers<[1], [0], [0], [1], [0, 0, 1, 1], [], []>} : vector<64x128xbf16>, vector<128x64xbf16>, vector<64x64xf32> -> vector<64x64xf32>
    %6 = tpu.iota {dimensions = array<i32: 0>} : vector<64x1xi32>
    %c8_i32 = arith.constant 8 : i32
    %7 = vector.broadcast %c8_i32 : i32 to vector<64x1xi32>
    %8 = arith.cmpi slt, %6, %7 : vector<64x1xi32>
    %c8_i32_6 = arith.constant 8 : i32
    %9 = tpu.dynamic_rotate %3 by %c8_i32_6 dim 0 : vector<64x64xf32>, i32 -> vector<64x64xf32>
    %cst_7 = arith.constant 0.000000e+00 : f32
    %10 = vector.shape_cast %8 : vector<64x1xi1> to vector<64x1xi1>
    %11 = vector.broadcast %10 : vector<64x1xi1> to vector<64x64xi1>
    %12 = vector.broadcast %cst_7 : f32 to vector<64x64xf32>
    %13 = arith.select %11, %12, %9 : vector<64x64xi1>, vector<64x64xf32>
    %c56_i32 = arith.constant 56 : i32
    %14 = vector.broadcast %c56_i32 : i32 to vector<64x1xi32>
    %15 = arith.cmpi sge, %6, %14 : vector<64x1xi32>
    %c56_i32_8 = arith.constant 56 : i32
    %16 = tpu.dynamic_rotate %3 by %c56_i32_8 dim 0 : vector<64x64xf32>, i32 -> vector<64x64xf32>
    %cst_9 = arith.constant 0.000000e+00 : f32
    %17 = vector.shape_cast %15 : vector<64x1xi1> to vector<64x1xi1>
    %18 = vector.broadcast %17 : vector<64x1xi1> to vector<64x64xi1>
    %19 = vector.broadcast %cst_9 : f32 to vector<64x64xf32>
    %20 = arith.select %18, %19, %16 : vector<64x64xi1>, vector<64x64xf32>
    %c0_10 = arith.constant 0 : index
    %c0_11 = arith.constant 0 : index
    %21 = vector.load %arg4[%c0_10, %c0_11] : memref<3x64xf32, #tpu.memory_space<vmem>>, vector<1x64xf32>
    %22 = vector.broadcast %21 : vector<1x64xf32> to vector<64x64xf32>
    %23 = arith.mulf %13, %22 : vector<64x64xf32>
    %c1 = arith.constant 1 : index
    %c0_12 = arith.constant 0 : index
    %24 = vector.load %arg4[%c1, %c0_12] : memref<3x64xf32, #tpu.memory_space<vmem>>, vector<1x64xf32>
    %25 = vector.broadcast %24 : vector<1x64xf32> to vector<64x64xf32>
    %26 = arith.mulf %3, %25 : vector<64x64xf32>
    %27 = arith.addf %23, %26 : vector<64x64xf32>
    %c2 = arith.constant 2 : index
    %c0_13 = arith.constant 0 : index
    %28 = vector.load %arg4[%c2, %c0_13] : memref<3x64xf32, #tpu.memory_space<vmem>>, vector<1x64xf32>
    %29 = vector.broadcast %28 : vector<1x64xf32> to vector<64x64xf32>
    %30 = arith.mulf %20, %29 : vector<64x64xf32>
    %31 = arith.addf %27, %30 : vector<64x64xf32>
    %c0_14 = arith.constant 0 : index
    %c0_15 = arith.constant 0 : index
    %32 = vector.load %arg5[%c0_14, %c0_15] : memref<1x64xf32, #tpu.memory_space<vmem>>, vector<1x64xf32>
    %33 = vector.broadcast %32 : vector<1x64xf32> to vector<64x64xf32>
    %34 = arith.addf %31, %33 : vector<64x64xf32>
    %35 = arith.negf %34 : vector<64x64xf32>
    %36 = math.exp %35 : vector<64x64xf32>
    %cst_16 = arith.constant 1.000000e+00 : f32
    %37 = vector.broadcast %cst_16 : f32 to vector<64x64xf32>
    %38 = arith.addf %37, %36 : vector<64x64xf32>
    %39 = arith.divf %37, %38 : vector<64x64xf32>
    %40 = arith.mulf %34, %39 : vector<64x64xf32>
    %41 = arith.truncf %40 : vector<64x64xf32> to vector<64x64xbf16>
    %c0_17 = arith.constant 0 : index
    %c0_18 = arith.constant 0 : index
    %42 = vector.load %arg6[%c0_17, %c0_18] : memref<64x16xbf16, #tpu.memory_space<vmem>>, vector<64x16xbf16>
    %cst_19 = arith.constant dense<0.000000e+00> : vector<64x16xf32>
    %43 = tpu.matmul %41, %42, %cst_19 {dimension_numbers = #tpu.dot_dimension_numbers<[1], [0], [0], [1], [0, 0, 1, 1], [], []>} : vector<64x64xbf16>, vector<64x16xbf16>, vector<64x16xf32> -> vector<64x16xf32>
    %c0_20 = arith.constant 0 : index
    %c0_21 = arith.constant 0 : index
    %44 = vector.load %arg12[%c0_20, %c0_21] : memref<64x16xf32, #tpu.memory_space<vmem>>, vector<64x16xf32>
    tpu.vector_store %arg12[%c0_20, %c0_21], %43 {strides = array<i32>} : memref<64x16xf32, #tpu.memory_space<vmem>>, vector<64x16xf32>,
    %c0_22 = arith.constant 0 : index
    %c0_23 = arith.constant 0 : index
    %45 = vector.load %arg7[%c0_22, %c0_23] : memref<64x16xbf16, #tpu.memory_space<vmem>>, vector<64x16xbf16>
    %cst_24 = arith.constant dense<0.000000e+00> : vector<64x16xf32>
    %46 = tpu.matmul %41, %45, %cst_24 {dimension_numbers = #tpu.dot_dimension_numbers<[1], [0], [0], [1], [0, 0, 1, 1], [], []>} : vector<64x64xbf16>, vector<64x16xbf16>, vector<64x16xf32> -> vector<64x16xf32>
    %c0_25 = arith.constant 0 : index
    %c0_26 = arith.constant 0 : index
    %47 = vector.load %arg8[%c0_25, %c0_26] : memref<1x16xf32, #tpu.memory_space<vmem>>, vector<1x16xf32>
    %cst_27 = arith.constant 0.000000e+00 : f32
    %48 = vector.broadcast %cst_27 : f32 to vector<1x16xf32>
    %49 = arith.maximumf %47, %48 : vector<1x16xf32>
    %50 = vector.broadcast %cst_27 : f32 to vector<1x16xf32>
    %51 = arith.subf %47, %50 : vector<1x16xf32>
    %52 = arith.cmpf one, %51, %51 : vector<1x16xf32>
    %53 = vector.broadcast %cst_27 : f32 to vector<1x16xf32>
    %54 = arith.addf %47, %53 : vector<1x16xf32>
    %55 = math.absf %51 : vector<1x16xf32>
    %cst_28 = arith.constant 0.000000e+00 : f32
    %56 = vector.broadcast %cst_28 : f32 to vector<1x16xf32>
    %57 = arith.subf %56, %55 : vector<1x16xf32>
    %58 = math.exp %57 : vector<1x16xf32>
    %59 = math.log1p %58 : vector<1x16xf32>
    %60 = arith.addf %49, %59 : vector<1x16xf32>
    %61 = arith.select %52, %54, %60 : vector<1x16xi1>, vector<1x16xf32>
    %cst_29 = arith.constant 0.000000e+00 : f32
    %62 = vector.broadcast %cst_29 : f32 to vector<1x16xf32>
    %63 = arith.subf %62, %61 : vector<1x16xf32>
    %64 = math.exp %63 : vector<1x16xf32>
    %65 = vector.shape_cast %64 : vector<1x16xf32> to vector<1x16xf32>
    %66 = vector.broadcast %65 : vector<1x16xf32> to vector<8x16xf32>
    %cst_30 = arith.constant 0.000000e+00 : f32
    %67 = vector.broadcast %cst_30 : f32 to vector<8x16xf32>
    %c0_i32 = arith.constant 0 : i32
    %c8_i32_31 = arith.constant 8 : i32
    %68 = arith.muli %c0_i32, %c8_i32_31 : i32
    %69 = tpu.assume_multiple %68, 8 : i32
    %70 = arith.mulf %67, %66 : vector<8x16xf32>
    %71 = arith.index_cast %69 : i32 to index
    %c0_32 = arith.constant 0 : index
    %72 = vector.load %arg12[%71, %c0_32] : memref<64x16xf32, #tpu.memory_space<vmem>>, vector<8x16xf32>
    %73 = arith.addf %70, %72 : vector<8x16xf32>
    %74 = arith.index_cast %69 : i32 to index
    %c0_33 = arith.constant 0 : index
    %75 = vector.load %arg13[%74, %c0_33] : memref<64x16xf32, #tpu.memory_space<vmem>>, vector<8x16xf32>
    tpu.vector_store %arg13[%74, %c0_33], %73 {strides = array<i32>} : memref<64x16xf32, #tpu.memory_space<vmem>>, vector<8x16xf32>,
    %c1_i32 = arith.constant 1 : i32
    %c8_i32_34 = arith.constant 8 : i32
    %76 = arith.muli %c1_i32, %c8_i32_34 : i32
    %77 = tpu.assume_multiple %76, 8 : i32
    %78 = arith.mulf %73, %66 : vector<8x16xf32>
    %79 = arith.index_cast %77 : i32 to index
    %c0_35 = arith.constant 0 : index
    %80 = vector.load %arg12[%79, %c0_35] : memref<64x16xf32, #tpu.memory_space<vmem>>, vector<8x16xf32>
    %81 = arith.addf %78, %80 : vector<8x16xf32>
    %82 = arith.index_cast %77 : i32 to index
    %c0_36 = arith.constant 0 : index
    %83 = vector.load %arg13[%82, %c0_36] : memref<64x16xf32, #tpu.memory_space<vmem>>, vector<8x16xf32>
    tpu.vector_store %arg13[%82, %c0_36], %81 {strides = array<i32>} : memref<64x16xf32, #tpu.memory_space<vmem>>, vector<8x16xf32>,
    %c2_i32 = arith.constant 2 : i32
    %c8_i32_37 = arith.constant 8 : i32
    %84 = arith.muli %c2_i32, %c8_i32_37 : i32
    %85 = tpu.assume_multiple %84, 8 : i32
    %86 = arith.mulf %81, %66 : vector<8x16xf32>
    %87 = arith.index_cast %85 : i32 to index
    %c0_38 = arith.constant 0 : index
    %88 = vector.load %arg12[%87, %c0_38] : memref<64x16xf32, #tpu.memory_space<vmem>>, vector<8x16xf32>
    %89 = arith.addf %86, %88 : vector<8x16xf32>
    %90 = arith.index_cast %85 : i32 to index
    %c0_39 = arith.constant 0 : index
    %91 = vector.load %arg13[%90, %c0_39] : memref<64x16xf32, #tpu.memory_space<vmem>>, vector<8x16xf32>
    tpu.vector_store %arg13[%90, %c0_39], %89 {strides = array<i32>} : memref<64x16xf32, #tpu.memory_space<vmem>>, vector<8x16xf32>,
    %c3_i32 = arith.constant 3 : i32
    %c8_i32_40 = arith.constant 8 : i32
    %92 = arith.muli %c3_i32, %c8_i32_40 : i32
    %93 = tpu.assume_multiple %92, 8 : i32
    %94 = arith.mulf %89, %66 : vector<8x16xf32>
    %95 = arith.index_cast %93 : i32 to index
    %c0_41 = arith.constant 0 : index
    %96 = vector.load %arg12[%95, %c0_41] : memref<64x16xf32, #tpu.memory_space<vmem>>, vector<8x16xf32>
    %97 = arith.addf %94, %96 : vector<8x16xf32>
    %98 = arith.index_cast %93 : i32 to index
    %c0_42 = arith.constant 0 : index
    %99 = vector.load %arg13[%98, %c0_42] : memref<64x16xf32, #tpu.memory_space<vmem>>, vector<8x16xf32>
    tpu.vector_store %arg13[%98, %c0_42], %97 {strides = array<i32>} : memref<64x16xf32, #tpu.memory_space<vmem>>, vector<8x16xf32>,
    %c4_i32 = arith.constant 4 : i32
    %c8_i32_43 = arith.constant 8 : i32
    %100 = arith.muli %c4_i32, %c8_i32_43 : i32
    %101 = tpu.assume_multiple %100, 8 : i32
    %102 = arith.mulf %97, %66 : vector<8x16xf32>
    %103 = arith.index_cast %101 : i32 to index
    %c0_44 = arith.constant 0 : index
    %104 = vector.load %arg12[%103, %c0_44] : memref<64x16xf32, #tpu.memory_space<vmem>>, vector<8x16xf32>
    %105 = arith.addf %102, %104 : vector<8x16xf32>
    %106 = arith.index_cast %101 : i32 to index
    %c0_45 = arith.constant 0 : index
    %107 = vector.load %arg13[%106, %c0_45] : memref<64x16xf32, #tpu.memory_space<vmem>>, vector<8x16xf32>
    tpu.vector_store %arg13[%106, %c0_45], %105 {strides = array<i32>} : memref<64x16xf32, #tpu.memory_space<vmem>>, vector<8x16xf32>,
    %c5_i32 = arith.constant 5 : i32
    %c8_i32_46 = arith.constant 8 : i32
    %108 = arith.muli %c5_i32, %c8_i32_46 : i32
    %109 = tpu.assume_multiple %108, 8 : i32
    %110 = arith.mulf %105, %66 : vector<8x16xf32>
    %111 = arith.index_cast %109 : i32 to index
    %c0_47 = arith.constant 0 : index
    %112 = vector.load %arg12[%111, %c0_47] : memref<64x16xf32, #tpu.memory_space<vmem>>, vector<8x16xf32>
    %113 = arith.addf %110, %112 : vector<8x16xf32>
    %114 = arith.index_cast %109 : i32 to index
    %c0_48 = arith.constant 0 : index
    %115 = vector.load %arg13[%114, %c0_48] : memref<64x16xf32, #tpu.memory_space<vmem>>, vector<8x16xf32>
    tpu.vector_store %arg13[%114, %c0_48], %113 {strides = array<i32>} : memref<64x16xf32, #tpu.memory_space<vmem>>, vector<8x16xf32>,
    %c6_i32 = arith.constant 6 : i32
    %c8_i32_49 = arith.constant 8 : i32
    %116 = arith.muli %c6_i32, %c8_i32_49 : i32
    %117 = tpu.assume_multiple %116, 8 : i32
    %118 = arith.mulf %113, %66 : vector<8x16xf32>
    %119 = arith.index_cast %117 : i32 to index
    %c0_50 = arith.constant 0 : index
    %120 = vector.load %arg12[%119, %c0_50] : memref<64x16xf32, #tpu.memory_space<vmem>>, vector<8x16xf32>
    %121 = arith.addf %118, %120 : vector<8x16xf32>
    %122 = arith.index_cast %117 : i32 to index
    %c0_51 = arith.constant 0 : index
    %123 = vector.load %arg13[%122, %c0_51] : memref<64x16xf32, #tpu.memory_space<vmem>>, vector<8x16xf32>
    tpu.vector_store %arg13[%122, %c0_51], %121 {strides = array<i32>} : memref<64x16xf32, #tpu.memory_space<vmem>>, vector<8x16xf32>,
    %c7_i32 = arith.constant 7 : i32
    %c8_i32_52 = arith.constant 8 : i32
    %124 = arith.muli %c7_i32, %c8_i32_52 : i32
    %125 = tpu.assume_multiple %124, 8 : i32
    %126 = arith.mulf %121, %66 : vector<8x16xf32>
    %127 = arith.index_cast %125 : i32 to index
    %c0_53 = arith.constant 0 : index
    %128 = vector.load %arg12[%127, %c0_53] : memref<64x16xf32, #tpu.memory_space<vmem>>, vector<8x16xf32>
    %129 = arith.addf %126, %128 : vector<8x16xf32>
    %130 = arith.index_cast %125 : i32 to index
    %c0_54 = arith.constant 0 : index
    %131 = vector.load %arg13[%130, %c0_54] : memref<64x16xf32, #tpu.memory_space<vmem>>, vector<8x16xf32>
    tpu.vector_store %arg13[%130, %c0_54], %129 {strides = array<i32>} : memref<64x16xf32, #tpu.memory_space<vmem>>, vector<8x16xf32>,
    %c8_i32_55 = arith.constant 8 : i32
    %c0_56 = arith.constant 0 : index
    %c0_57 = arith.constant 0 : index
    %132 = vector.load %arg13[%c0_56, %c0_57] : memref<64x16xf32, #tpu.memory_space<vmem>>, vector<64x16xf32>
    %133 = arith.mulf %132, %46 : vector<64x16xf32>
    %cst_58 = arith.constant dense<0.000000e+00> : vector<64xf32>
    %134 = vector.multi_reduction <add>, %133, %cst_58 [1] : vector<64x16xf32> to vector<64xf32>
    %135 = vector.shape_cast %134 : vector<64xf32> to vector<64x1xf32>
    %c0_59 = arith.constant 0 : index
    %c0_60 = arith.constant 0 : index
    %136 = vector.load %arg9[%c0_59, %c0_60] : memref<1x64xf32, #tpu.memory_space<vmem>>, vector<1x64xf32>
    %137 = vector.broadcast %136 : vector<1x64xf32> to vector<64x64xf32>
    %138 = arith.mulf %40, %137 : vector<64x64xf32>
    %139 = vector.broadcast %135 : vector<64x1xf32> to vector<64x64xf32>
    %140 = arith.addf %139, %138 : vector<64x64xf32>
    %141 = arith.negf %5 : vector<64x64xf32>
    %142 = math.exp %141 : vector<64x64xf32>
    %cst_61 = arith.constant 1.000000e+00 : f32
    %143 = vector.broadcast %cst_61 : f32 to vector<64x64xf32>
    %144 = arith.addf %143, %142 : vector<64x64xf32>
    %145 = arith.divf %143, %144 : vector<64x64xf32>
    %146 = arith.mulf %5, %145 : vector<64x64xf32>
    %147 = arith.mulf %140, %146 : vector<64x64xf32>
    %148 = arith.truncf %147 : vector<64x64xf32> to vector<64x64xbf16>
    %c0_62 = arith.constant 0 : index
    %c0_63 = arith.constant 0 : index
    %149 = vector.load %arg10[%c0_62, %c0_63] : memref<64x128xbf16, #tpu.memory_space<vmem>>, vector<64x128xbf16>
    %cst_64 = arith.constant dense<0.000000e+00> : vector<64x128xf32>
    %150 = tpu.matmul %148, %149, %cst_64 {dimension_numbers = #tpu.dot_dimension_numbers<[1], [0], [0], [1], [0, 0, 1, 1], [], []>} : vector<64x64xbf16>, vector<64x128xbf16>, vector<64x128xf32> -> vector<64x128xf32>
    %c0_65 = arith.constant 0 : index
    %c0_66 = arith.constant 0 : index
    %151 = vector.load %arg11[%c0_65, %c0_66] : memref<64x128xf32, #tpu.memory_space<vmem>>, vector<64x128xf32>
    tpu.vector_store %arg11[%c0_65, %c0_66], %150 {strides = array<i32>} : memref<64x128xf32, #tpu.memory_space<vmem>>, vector<64x128xf32>,
    return
  }
  func.func @transform_0(%arg0: i32) -> (i32, i32) {
    %c0_i32 = arith.constant 0 : i32
    %c0_i32_0 = arith.constant 0 : i32
    return %arg0, %c0_i32 : i32, i32
  }
  func.func @transform_1(%arg0: i32) -> (i32, i32) {
    %c0_i32 = arith.constant 0 : i32
    %c0_i32_0 = arith.constant 0 : i32
    %c0_i32_1 = arith.constant 0 : i32
    return %c0_i32, %c0_i32_0 : i32, i32
  }
  func.func @transform_2(%arg0: i32) -> (i32, i32) {
    %c0_i32 = arith.constant 0 : i32
    %c0_i32_0 = arith.constant 0 : i32
    %c0_i32_1 = arith.constant 0 : i32
    return %c0_i32, %c0_i32_0 : i32, i32
  }
  func.func @transform_3(%arg0: i32) -> (i32, i32) {
    %c0_i32 = arith.constant 0 : i32
    %c0_i32_0 = arith.constant 0 : i32
    %c0_i32_1 = arith.constant 0 : i32
    return %c0_i32, %c0_i32_0 : i32, i32
  }
  func.func @transform_4(%arg0: i32) -> (i32, i32) {
    %c0_i32 = arith.constant 0 : i32
    %c0_i32_0 = arith.constant 0 : i32
    %c0_i32_1 = arith.constant 0 : i32
    return %c0_i32, %c0_i32_0 : i32, i32
  }
  func.func @transform_5(%arg0: i32) -> (i32, i32) {
    %c0_i32 = arith.constant 0 : i32
    %c0_i32_0 = arith.constant 0 : i32
    %c0_i32_1 = arith.constant 0 : i32
    return %c0_i32, %c0_i32_0 : i32, i32
  }
  func.func @transform_6(%arg0: i32) -> (i32, i32) {
    %c0_i32 = arith.constant 0 : i32
    %c0_i32_0 = arith.constant 0 : i32
    %c0_i32_1 = arith.constant 0 : i32
    return %c0_i32, %c0_i32_0 : i32, i32
  }
  func.func @transform_7(%arg0: i32) -> (i32, i32) {
    %c0_i32 = arith.constant 0 : i32
    %c0_i32_0 = arith.constant 0 : i32
    %c0_i32_1 = arith.constant 0 : i32
    return %c0_i32, %c0_i32_0 : i32, i32
  }
  func.func @transform_8(%arg0: i32) -> (i32, i32) {
    %c0_i32 = arith.constant 0 : i32
    %c0_i32_0 = arith.constant 0 : i32
    %c0_i32_1 = arith.constant 0 : i32
    return %c0_i32, %c0_i32_0 : i32, i32
  }
  func.func @transform_9(%arg0: i32) -> (i32, i32) {
    %c0_i32 = arith.constant 0 : i32
    %c0_i32_0 = arith.constant 0 : i32
    %c0_i32_1 = arith.constant 0 : i32
    return %c0_i32, %c0_i32_0 : i32, i32
  }
  func.func @transform_10(%arg0: i32) -> (i32, i32) {
    %c0_i32 = arith.constant 0 : i32
    %c0_i32_0 = arith.constant 0 : i32
    return %arg0, %c0_i32 : i32, i32
  }
}

module attributes {stable_mosaic.version = 11 : i64} {
  func.func @mamba_kernel(%arg0: i32, %arg1: memref<64x128xf32, #tpu.memory_space<vmem>>, %arg2: memref<128x64xbf16, #tpu.memory_space<vmem>>, %arg3: memref<128x64xbf16, #tpu.memory_space<vmem>>, %arg4: memref<3x64xf32, #tpu.memory_space<vmem>>, %arg5: memref<1x64xf32, #tpu.memory_space<vmem>>, %arg6: memref<64x16xbf16, #tpu.memory_space<vmem>>, %arg7: memref<64x16xbf16, #tpu.memory_space<vmem>>, %arg8: memref<1x16xf32, #tpu.memory_space<vmem>>, %arg9: memref<1x64xf32, #tpu.memory_space<vmem>>, %arg10: memref<64x128xbf16, #tpu.memory_space<vmem>>, %arg11: memref<64x128xf32, #tpu.memory_space<vmem>>, %arg12: memref<64x16xf32, #tpu.memory_space<vmem>>, %arg13: memref<64x16xf32, #tpu.memory_space<vmem>>) attributes {dimension_semantics = [#tpu.dimension_semantics<parallel>], iteration_bounds = array<i64: 1>, scalar_prefetch = 0 : i64, scratch_operands = 2 : i64, tpu.core_type = #tpu.core_type<tc>, window_params = [{transform_indices = @transform_0, window_bounds = array<i64: 64, 128>}, {pipeline_mode = #tpu.pipeline_mode<synchronous>, transform_indices = @transform_1, window_bounds = array<i64: 128, 64>}, {pipeline_mode = #tpu.pipeline_mode<synchronous>, transform_indices = @transform_2, window_bounds = array<i64: 128, 64>}, {pipeline_mode = #tpu.pipeline_mode<synchronous>, transform_indices = @transform_3, window_bounds = array<i64: 3, 64>}, {pipeline_mode = #tpu.pipeline_mode<synchronous>, transform_indices = @transform_4, window_bounds = array<i64: 1, 64>}, {pipeline_mode = #tpu.pipeline_mode<synchronous>, transform_indices = @transform_5, window_bounds = array<i64: 64, 16>}, {pipeline_mode = #tpu.pipeline_mode<synchronous>, transform_indices = @transform_6, window_bounds = array<i64: 64, 16>}, {pipeline_mode = #tpu.pipeline_mode<synchronous>, transform_indices = @transform_7, window_bounds = array<i64: 1, 16>}, {pipeline_mode = #tpu.pipeline_mode<synchronous>, transform_indices = @transform_8, window_bounds = array<i64: 1, 64>}, {pipeline_mode = #tpu.pipeline_mode<synchronous>, transform_indices = @transform_9, window_bounds = array<i64: 64, 128>}, {transform_indices = @transform_10, window_bounds = array<i64: 64, 128>}]} {
    %c0 = arith.constant 0 : index
    %c0_0 = arith.constant 0 : index
    %0 = vector.load %arg1[%c0, %c0_0] : memref<64x128xf32, #tpu.memory_space<vmem>>, vector<64x128xf32>
    %1 = arith.truncf %0 : vector<64x128xf32> to vector<64x128xbf16>
    %c0_1 = arith.constant 0 : index
    %c0_2 = arith.constant 0 : index
    %2 = vector.load %arg2[%c0_1, %c0_2] : memref<128x64xbf16, #tpu.memory_space<vmem>>, vector<128x64xbf16>
    %cst = arith.constant dense<0.000000e+00> : vector<64x64xf32>
    %3 = tpu.matmul %1, %2, %cst {dimension_numbers = #tpu.dot_dimension_numbers<[1], [0], [0], [1], [0, 0, 1, 1], [], []>} : vector<64x128xbf16>, vector<128x64xbf16>, vector<64x64xf32> -> vector<64x64xf32>
    %c0_3 = arith.constant 0 : index
    %c0_4 = arith.constant 0 : index
    %4 = vector.load %arg3[%c0_3, %c0_4] : memref<128x64xbf16, #tpu.memory_space<vmem>>, vector<128x64xbf16>
    %cst_5 = arith.constant dense<0.000000e+00> : vector<64x64xf32>
    %5 = tpu.matmul %1, %4, %cst_5 {dimension_numbers = #tpu.dot_dimension_numbers<[1], [0], [0], [1], [0, 0, 1, 1], [], []>} : vector<64x128xbf16>, vector<128x64xbf16>, vector<64x64xf32> -> vector<64x64xf32>
    %6 = tpu.iota {dimensions = array<i32: 0>} : vector<64x1xi32>
    %c8_i32 = arith.constant 8 : i32
    %7 = vector.broadcast %c8_i32 : i32 to vector<64x1xi32>
    %8 = arith.cmpi slt, %6, %7 : vector<64x1xi32>
    %c8_i32_6 = arith.constant 8 : i32
    %9 = tpu.dynamic_rotate %3 by %c8_i32_6 dim 0 : vector<64x64xf32>, i32 -> vector<64x64xf32>
    %cst_7 = arith.constant 0.000000e+00 : f32
    %10 = vector.shape_cast %8 : vector<64x1xi1> to vector<64x1xi1>
    %11 = vector.broadcast %10 : vector<64x1xi1> to vector<64x64xi1>
    %12 = vector.broadcast %cst_7 : f32 to vector<64x64xf32>
    %13 = arith.select %11, %12, %9 : vector<64x64xi1>, vector<64x64xf32>
    %c56_i32 = arith.constant 56 : i32
    %14 = vector.broadcast %c56_i32 : i32 to vector<64x1xi32>
    %15 = arith.cmpi sge, %6, %14 : vector<64x1xi32>
    %c56_i32_8 = arith.constant 56 : i32
    %16 = tpu.dynamic_rotate %3 by %c56_i32_8 dim 0 : vector<64x64xf32>, i32 -> vector<64x64xf32>
    %cst_9 = arith.constant 0.000000e+00 : f32
    %17 = vector.shape_cast %15 : vector<64x1xi1> to vector<64x1xi1>
    %18 = vector.broadcast %17 : vector<64x1xi1> to vector<64x64xi1>
    %19 = vector.broadcast %cst_9 : f32 to vector<64x64xf32>
    %20 = arith.select %18, %19, %16 : vector<64x64xi1>, vector<64x64xf32>
    %c0_10 = arith.constant 0 : index
    %c0_11 = arith.constant 0 : index
    %21 = vector.load %arg4[%c0_10, %c0_11] : memref<3x64xf32, #tpu.memory_space<vmem>>, vector<1x64xf32>
    %22 = vector.broadcast %21 : vector<1x64xf32> to vector<64x64xf32>
    %23 = arith.mulf %13, %22 : vector<64x64xf32>
    %c1 = arith.constant 1 : index
    %c0_12 = arith.constant 0 : index
    %24 = vector.load %arg4[%c1, %c0_12] : memref<3x64xf32, #tpu.memory_space<vmem>>, vector<1x64xf32>
    %25 = vector.broadcast %24 : vector<1x64xf32> to vector<64x64xf32>
    %26 = arith.mulf %3, %25 : vector<64x64xf32>
    %27 = arith.addf %23, %26 : vector<64x64xf32>
    %c2 = arith.constant 2 : index
    %c0_13 = arith.constant 0 : index
    %28 = vector.load %arg4[%c2, %c0_13] : memref<3x64xf32, #tpu.memory_space<vmem>>, vector<1x64xf32>
    %29 = vector.broadcast %28 : vector<1x64xf32> to vector<64x64xf32>
    %30 = arith.mulf %20, %29 : vector<64x64xf32>
    %31 = arith.addf %27, %30 : vector<64x64xf32>
    %c0_14 = arith.constant 0 : index
    %c0_15 = arith.constant 0 : index
    %32 = vector.load %arg5[%c0_14, %c0_15] : memref<1x64xf32, #tpu.memory_space<vmem>>, vector<1x64xf32>
    %33 = vector.broadcast %32 : vector<1x64xf32> to vector<64x64xf32>
    %34 = arith.addf %31, %33 : vector<64x64xf32>
    %35 = arith.negf %34 : vector<64x64xf32>
    %36 = math.exp %35 : vector<64x64xf32>
    %cst_16 = arith.constant 1.000000e+00 : f32
    %37 = vector.broadcast %cst_16 : f32 to vector<64x64xf32>
    %38 = arith.addf %37, %36 : vector<64x64xf32>
    %39 = arith.divf %37, %38 : vector<64x64xf32>
    %40 = arith.mulf %34, %39 : vector<64x64xf32>
    %41 = arith.truncf %40 : vector<64x64xf32> to vector<64x64xbf16>
    %c0_17 = arith.constant 0 : index
    %c0_18 = arith.constant 0 : index
    %42 = vector.load %arg6[%c0_17, %c0_18] : memref<64x16xbf16, #tpu.memory_space<vmem>>, vector<64x16xbf16>
    %cst_19 = arith.constant dense<0.000000e+00> : vector<64x16xf32>
    %43 = tpu.matmul %41, %42, %cst_19 {dimension_numbers = #tpu.dot_dimension_numbers<[1], [0], [0], [1], [0, 0, 1, 1], [], []>} : vector<64x64xbf16>, vector<64x16xbf16>, vector<64x16xf32> -> vector<64x16xf32>
    %c0_20 = arith.constant 0 : index
    %c0_21 = arith.constant 0 : index
    %44 = vector.load %arg12[%c0_20, %c0_21] : memref<64x16xf32, #tpu.memory_space<vmem>>, vector<64x16xf32>
    tpu.vector_store %arg12[%c0_20, %c0_21], %43 {strides = array<i32>} : memref<64x16xf32, #tpu.memory_space<vmem>>, vector<64x16xf32>,
    %c0_22 = arith.constant 0 : index
    %c0_23 = arith.constant 0 : index
    %45 = vector.load %arg7[%c0_22, %c0_23] : memref<64x16xbf16, #tpu.memory_space<vmem>>, vector<64x16xbf16>
    %cst_24 = arith.constant dense<0.000000e+00> : vector<64x16xf32>
    %46 = tpu.matmul %41, %45, %cst_24 {dimension_numbers = #tpu.dot_dimension_numbers<[1], [0], [0], [1], [0, 0, 1, 1], [], []>} : vector<64x64xbf16>, vector<64x16xbf16>, vector<64x16xf32> -> vector<64x16xf32>
    %c0_25 = arith.constant 0 : index
    %c0_26 = arith.constant 0 : index
    %47 = vector.load %arg8[%c0_25, %c0_26] : memref<1x16xf32, #tpu.memory_space<vmem>>, vector<1x16xf32>
    %cst_27 = arith.constant 0.000000e+00 : f32
    %48 = vector.broadcast %cst_27 : f32 to vector<1x16xf32>
    %49 = arith.maximumf %47, %48 : vector<1x16xf32>
    %50 = vector.broadcast %cst_27 : f32 to vector<1x16xf32>
    %51 = arith.subf %47, %50 : vector<1x16xf32>
    %52 = arith.cmpf one, %51, %51 : vector<1x16xf32>
    %53 = vector.broadcast %cst_27 : f32 to vector<1x16xf32>
    %54 = arith.addf %47, %53 : vector<1x16xf32>
    %55 = math.absf %51 : vector<1x16xf32>
    %cst_28 = arith.constant 0.000000e+00 : f32
    %56 = vector.broadcast %cst_28 : f32 to vector<1x16xf32>
    %57 = arith.subf %56, %55 : vector<1x16xf32>
    %58 = math.exp %57 : vector<1x16xf32>
    %59 = math.log1p %58 : vector<1x16xf32>
    %60 = arith.addf %49, %59 : vector<1x16xf32>
    %61 = arith.select %52, %54, %60 : vector<1x16xi1>, vector<1x16xf32>
    %cst_29 = arith.constant 0.000000e+00 : f32
    %62 = vector.broadcast %cst_29 : f32 to vector<1x16xf32>
    %63 = arith.subf %62, %61 : vector<1x16xf32>
    %64 = math.exp %63 : vector<1x16xf32>
    %65 = vector.shape_cast %64 : vector<1x16xf32> to vector<1x16xf32>
    %66 = vector.broadcast %65 : vector<1x16xf32> to vector<8x16xf32>
    %cst_30 = arith.constant 0.000000e+00 : f32
    %67 = vector.broadcast %cst_30 : f32 to vector<8x16xf32>
    %c0_i32 = arith.constant 0 : i32
    %c8_i32_31 = arith.constant 8 : i32
    %68 = arith.muli %c0_i32, %c8_i32_31 : i32
    %69 = tpu.assume_multiple %68, 8 : i32
    %70 = arith.mulf %67, %66 : vector<8x16xf32>
    %71 = arith.index_cast %69 : i32 to index
    %c0_32 = arith.constant 0 : index
    %72 = vector.load %arg12[%71, %c0_32] : memref<64x16xf32, #tpu.memory_space<vmem>>, vector<8x16xf32>
    %73 = arith.addf %70, %72 : vector<8x16xf32>
    %74 = arith.index_cast %69 : i32 to index
    %c0_33 = arith.constant 0 : index
    %75 = vector.load %arg13[%74, %c0_33] : memref<64x16xf32, #tpu.memory_space<vmem>>, vector<8x16xf32>
    tpu.vector_store %arg13[%74, %c0_33], %73 {strides = array<i32>} : memref<64x16xf32, #tpu.memory_space<vmem>>, vector<8x16xf32>,
    %c1_i32 = arith.constant 1 : i32
    %c8_i32_34 = arith.constant 8 : i32
    %76 = arith.muli %c1_i32, %c8_i32_34 : i32
    %77 = tpu.assume_multiple %76, 8 : i32
    %78 = arith.mulf %73, %66 : vector<8x16xf32>
    %79 = arith.index_cast %77 : i32 to index
    %c0_35 = arith.constant 0 : index
    %80 = vector.load %arg12[%79, %c0_35] : memref<64x16xf32, #tpu.memory_space<vmem>>, vector<8x16xf32>
    %81 = arith.addf %78, %80 : vector<8x16xf32>
    %82 = arith.index_cast %77 : i32 to index
    %c0_36 = arith.constant 0 : index
    %83 = vector.load %arg13[%82, %c0_36] : memref<64x16xf32, #tpu.memory_space<vmem>>, vector<8x16xf32>
    tpu.vector_store %arg13[%82, %c0_36], %81 {strides = array<i32>} : memref<64x16xf32, #tpu.memory_space<vmem>>, vector<8x16xf32>,
    %c2_i32 = arith.constant 2 : i32
    %c8_i32_37 = arith.constant 8 : i32
    %84 = arith.muli %c2_i32, %c8_i32_37 : i32
    %85 = tpu.assume_multiple %84, 8 : i32
    %86 = arith.mulf %81, %66 : vector<8x16xf32>
    %87 = arith.index_cast %85 : i32 to index
    %c0_38 = arith.constant 0 : index
    %88 = vector.load %arg12[%87, %c0_38] : memref<64x16xf32, #tpu.memory_space<vmem>>, vector<8x16xf32>
    %89 = arith.addf %86, %88 : vector<8x16xf32>
    %90 = arith.index_cast %85 : i32 to index
    %c0_39 = arith.constant 0 : index
    %91 = vector.load %arg13[%90, %c0_39] : memref<64x16xf32, #tpu.memory_space<vmem>>, vector<8x16xf32>
    tpu.vector_store %arg13[%90, %c0_39], %89 {strides = array<i32>} : memref<64x16xf32, #tpu.memory_space<vmem>>, vector<8x16xf32>,
    %c3_i32 = arith.constant 3 : i32
    %c8_i32_40 = arith.constant 8 : i32
    %92 = arith.muli %c3_i32, %c8_i32_40 : i32
    %93 = tpu.assume_multiple %92, 8 : i32
    %94 = arith.mulf %89, %66 : vector<8x16xf32>
    %95 = arith.index_cast %93 : i32 to index
    %c0_41 = arith.constant 0 : index
    %96 = vector.load %arg12[%95, %c0_41] : memref<64x16xf32, #tpu.memory_space<vmem>>, vector<8x16xf32>
    %97 = arith.addf %94, %96 : vector<8x16xf32>
    %98 = arith.index_cast %93 : i32 to index
    %c0_42 = arith.constant 0 : index
    %99 = vector.load %arg13[%98, %c0_42] : memref<64x16xf32, #tpu.memory_space<vmem>>, vector<8x16xf32>
    tpu.vector_store %arg13[%98, %c0_42], %97 {strides = array<i32>} : memref<64x16xf32, #tpu.memory_space<vmem>>, vector<8x16xf32>,
    %c4_i32 = arith.constant 4 : i32
    %c8_i32_43 = arith.constant 8 : i32
    %100 = arith.muli %c4_i32, %c8_i32_43 : i32
    %101 = tpu.assume_multiple %100, 8 : i32
    %102 = arith.mulf %97, %66 : vector<8x16xf32>
    %103 = arith.index_cast %101 : i32 to index
    %c0_44 = arith.constant 0 : index
    %104 = vector.load %arg12[%103, %c0_44] : memref<64x16xf32, #tpu.memory_space<vmem>>, vector<8x16xf32>
    %105 = arith.addf %102, %104 : vector<8x16xf32>
    %106 = arith.index_cast %101 : i32 to index
    %c0_45 = arith.constant 0 : index
    %107 = vector.load %arg13[%106, %c0_45] : memref<64x16xf32, #tpu.memory_space<vmem>>, vector<8x16xf32>
    tpu.vector_store %arg13[%106, %c0_45], %105 {strides = array<i32>} : memref<64x16xf32, #tpu.memory_space<vmem>>, vector<8x16xf32>,
    %c5_i32 = arith.constant 5 : i32
    %c8_i32_46 = arith.constant 8 : i32
    %108 = arith.muli %c5_i32, %c8_i32_46 : i32
    %109 = tpu.assume_multiple %108, 8 : i32
    %110 = arith.mulf %105, %66 : vector<8x16xf32>
    %111 = arith.index_cast %109 : i32 to index
    %c0_47 = arith.constant 0 : index
    %112 = vector.load %arg12[%111, %c0_47] : memref<64x16xf32, #tpu.memory_space<vmem>>, vector<8x16xf32>
    %113 = arith.addf %110, %112 : vector<8x16xf32>
    %114 = arith.index_cast %109 : i32 to index
    %c0_48 = arith.constant 0 : index
    %115 = vector.load %arg13[%114, %c0_48] : memref<64x16xf32, #tpu.memory_space<vmem>>, vector<8x16xf32>
    tpu.vector_store %arg13[%114, %c0_48], %113 {strides = array<i32>} : memref<64x16xf32, #tpu.memory_space<vmem>>, vector<8x16xf32>,
    %c6_i32 = arith.constant 6 : i32
    %c8_i32_49 = arith.constant 8 : i32
    %116 = arith.muli %c6_i32, %c8_i32_49 : i32
    %117 = tpu.assume_multiple %116, 8 : i32
    %118 = arith.mulf %113, %66 : vector<8x16xf32>
    %119 = arith.index_cast %117 : i32 to index
    %c0_50 = arith.constant 0 : index
    %120 = vector.load %arg12[%119, %c0_50] : memref<64x16xf32, #tpu.memory_space<vmem>>, vector<8x16xf32>
    %121 = arith.addf %118, %120 : vector<8x16xf32>
    %122 = arith.index_cast %117 : i32 to index
    %c0_51 = arith.constant 0 : index
    %123 = vector.load %arg13[%122, %c0_51] : memref<64x16xf32, #tpu.memory_space<vmem>>, vector<8x16xf32>
    tpu.vector_store %arg13[%122, %c0_51], %121 {strides = array<i32>} : memref<64x16xf32, #tpu.memory_space<vmem>>, vector<8x16xf32>,
    %c7_i32 = arith.constant 7 : i32
    %c8_i32_52 = arith.constant 8 : i32
    %124 = arith.muli %c7_i32, %c8_i32_52 : i32
    %125 = tpu.assume_multiple %124, 8 : i32
    %126 = arith.mulf %121, %66 : vector<8x16xf32>
    %127 = arith.index_cast %125 : i32 to index
    %c0_53 = arith.constant 0 : index
    %128 = vector.load %arg12[%127, %c0_53] : memref<64x16xf32, #tpu.memory_space<vmem>>, vector<8x16xf32>
    %129 = arith.addf %126, %128 : vector<8x16xf32>
    %130 = arith.index_cast %125 : i32 to index
    %c0_54 = arith.constant 0 : index
    %131 = vector.load %arg13[%130, %c0_54] : memref<64x16xf32, #tpu.memory_space<vmem>>, vector<8x16xf32>
    tpu.vector_store %arg13[%130, %c0_54], %129 {strides = array<i32>} : memref<64x16xf32, #tpu.memory_space<vmem>>, vector<8x16xf32>,
    %c8_i32_55 = arith.constant 8 : i32
    %c0_56 = arith.constant 0 : index
    %c0_57 = arith.constant 0 : index
    %132 = vector.load %arg13[%c0_56, %c0_57] : memref<64x16xf32, #tpu.memory_space<vmem>>, vector<64x16xf32>
    %133 = arith.mulf %132, %46 : vector<64x16xf32>
    %cst_58 = arith.constant dense<0.000000e+00> : vector<64xf32>
    %134 = vector.multi_reduction <add>, %133, %cst_58 [1] : vector<64x16xf32> to vector<64xf32>
    %135 = vector.shape_cast %134 : vector<64xf32> to vector<64x1xf32>
    %c0_59 = arith.constant 0 : index
    %c0_60 = arith.constant 0 : index
    %136 = vector.load %arg9[%c0_59, %c0_60] : memref<1x64xf32, #tpu.memory_space<vmem>>, vector<1x64xf32>
    %137 = vector.broadcast %136 : vector<1x64xf32> to vector<64x64xf32>
    %138 = arith.mulf %40, %137 : vector<64x64xf32>
    %139 = vector.broadcast %135 : vector<64x1xf32> to vector<64x64xf32>
    %140 = arith.addf %139, %138 : vector<64x64xf32>
    %141 = arith.negf %5 : vector<64x64xf32>
    %142 = math.exp %141 : vector<64x64xf32>
    %cst_61 = arith.constant 1.000000e+00 : f32
    %143 = vector.broadcast %cst_61 : f32 to vector<64x64xf32>
    %144 = arith.addf %143, %142 : vector<64x64xf32>
    %145 = arith.divf %143, %144 : vector<64x64xf32>
    %146 = arith.mulf %5, %145 : vector<64x64xf32>
    %147 = arith.mulf %140, %146 : vector<64x64xf32>
    %148 = arith.truncf %147 : vector<64x64xf32> to vector<64x64xbf16>
    %c0_62 = arith.constant 0 : index
    %c0_63 = arith.constant 0 : index
    %149 = vector.load %arg10[%c0_62, %c0_63] : memref<64x128xbf16, #tpu.memory_space<vmem>>, vector<64x128xbf16>
    %cst_64 = arith.constant dense<0.000000e+00> : vector<64x128xf32>
    %150 = tpu.matmul %148, %149, %cst_64 {dimension_numbers = #tpu.dot_dimension_numbers<[1], [0], [0], [1], [0, 0, 1, 1], [], []>} : vector<64x64xbf16>, vector<64x128xbf16>, vector<64x128xf32> -> vector<64x128xf32>
    %c0_65 = arith.constant 0 : index
    %c0_66 = arith.constant 0 : index
    %151 = vector.load %arg11[%c0_65, %c0_66] : memref<64x128xf32, #tpu.memory_space<vmem>>, vector<64x128xf32>
    tpu.vector_store %arg11[%c0_65, %c0_66], %150 {strides = array<i32>} : memref<64x128xf32, #tpu.memory_space<vmem>>, vector<64x128xf32>,
    return
  }
  func.func @transform_0(%arg0: i32) -> (i32, i32) {
    %c0_i32 = arith.constant 0 : i32
    %c0_i32_0 = arith.constant 0 : i32
    return %arg0, %c0_i32 : i32, i32
  }
  func.func @transform_1(%arg0: i32) -> (i32, i32) {
    %c0_i32 = arith.constant 0 : i32
    %c0_i32_0 = arith.constant 0 : i32
    %c0_i32_1 = arith.constant 0 : i32
    return %c0_i32, %c0_i32_0 : i32, i32
  }
  func.func @transform_2(%arg0: i32) -> (i32, i32) {
    %c0_i32 = arith.constant 0 : i32
    %c0_i32_0 = arith.constant 0 : i32
    %c0_i32_1 = arith.constant 0 : i32
    return %c0_i32, %c0_i32_0 : i32, i32
  }
  func.func @transform_3(%arg0: i32) -> (i32, i32) {
    %c0_i32 = arith.constant 0 : i32
    %c0_i32_0 = arith.constant 0 : i32
    %c0_i32_1 = arith.constant 0 : i32
    return %c0_i32, %c0_i32_0 : i32, i32
  }
  func.func @transform_4(%arg0: i32) -> (i32, i32) {
    %c0_i32 = arith.constant 0 : i32
    %c0_i32_0 = arith.constant 0 : i32
    %c0_i32_1 = arith.constant 0 : i32
    return %c0_i32, %c0_i32_0 : i32, i32
  }
  func.func @transform_5(%arg0: i32) -> (i32, i32) {
    %c0_i32 = arith.constant 0 : i32
    %c0_i32_0 = arith.constant 0 : i32
    %c0_i32_1 = arith.constant 0 : i32
    return %c0_i32, %c0_i32_0 : i32, i32
  }
  func.func @transform_6(%arg0: i32) -> (i32, i32) {
    %c0_i32 = arith.constant 0 : i32
    %c0_i32_0 = arith.constant 0 : i32
    %c0_i32_1 = arith.constant 0 : i32
    return %c0_i32, %c0_i32_0 : i32, i32
  }
  func.func @transform_7(%arg0: i32) -> (i32, i32) {
    %c0_i32 = arith.constant 0 : i32
    %c0_i32_0 = arith.constant 0 : i32
    %c0_i32_1 = arith.constant 0 : i32
    return %c0_i32, %c0_i32_0 : i32, i32
  }
  func.func @transform_8(%arg0: i32) -> (i32, i32) {
    %c0_i32 = arith.constant 0 : i32
    %c0_i32_0 = arith.constant 0 : i32
    %c0_i32_1 = arith.constant 0 : i32
    return %c0_i32, %c0_i32_0 : i32, i32
  }
  func.func @transform_9(%arg0: i32) -> (i32, i32) {
    %c0_i32 = arith.constant 0 : i32
    %c0_i32_0 = arith.constant 0 : i32
    %c0_i32_1 = arith.constant 0 : i32
    return %c0_i32, %c0_i32_0 : i32, i32
  }
  func.func @transform_10(%arg0: i32) -> (i32, i32) {
    %c0_i32 = arith.constant 0 : i32
    %c0_i32_0 = arith.constant 0 : i32
    return %arg0, %c0_i32 : i32, i32
  }
}

</mosaic_0001>

<llo_original>
// kernel: tpu_custom_call.1
$region0: #{tpu_custom_call.1}
  #allocation0 [shape = 'u32[]', space=smem, size = 0x4, offset = 0x4, fixed_abs, tag = 'smem constant byte address 0x4 - core index']
  #allocation1 [shape = 'u32[144,128]{1,0:T(1,128)}', space=vmem, size = 0x12000, scoped, tag = 'internal scratch']
  #allocation2 [shape = 'f32[64,16]{1,0:T(8,128)}', space=vmem, size = 0x8000, scoped, tag = 'scratch operand']
  #allocation3 [shape = 'f32[64,16]{1,0:T(8,128)}', space=vmem, size = 0x8000, scoped, tag = 'scratch operand']
  %s0 = inlined_call_operand.vmem [shape: f32[64,128], index: 0, kind: input, shape index: {}]
  %s1 = inlined_call_operand.vmem [shape: bf16[128,64], index: 1, kind: input, shape index: {}]
  %s2 = inlined_call_operand.vmem [shape: bf16[128,64], index: 2, kind: input, shape index: {}]
  %s3 = inlined_call_operand.vmem [shape: f32[3,64], index: 3, kind: input, shape index: {}]
  %s4 = inlined_call_operand.vmem [shape: f32[1,64], index: 4, kind: input, shape index: {}]
  %s5 = inlined_call_operand.vmem [shape: bf16[64,16], index: 5, kind: input, shape index: {}]
  %s6 = inlined_call_operand.vmem [shape: bf16[64,16], index: 6, kind: input, shape index: {}]
  %s7 = inlined_call_operand.vmem [shape: f32[1,16], index: 7, kind: input, shape index: {}]
  %s8 = inlined_call_operand.vmem [shape: f32[1,64], index: 8, kind: input, shape index: {}]
  %s9 = inlined_call_operand.vmem [shape: bf16[64,128], index: 9, kind: input, shape index: {}]
  %s10 = inlined_call_operand.hbm [shape: f32[64,128], index: 10, kind: output, shape index: {}]
  %s11 = sld [smem:[#allocation0]]
  $region50: #{tpu_custom_call.1} parent=0
    _
  %s13 = ssub.s32 1, %s11
  %s14 = scalar_select 0, %s13, %s11
  $region1: #{tpu_custom_call.1} parent=0
    #allocation4 [shape = 'u8[32768]{0}', space=vmem, size = 0x8000, scoped, tag = 'output window, operand 0, single buffered']
    #allocation5 [shape = 's32[1]{0}', space=sflag, size = 0x4, scoped, tag = 'scoped memory for tpu_custom_call.1']
    %15 = vsyncpa [#allocation5], 0
    // Predicated region
    $region2: #{tpu_custom_call.1} parent=1 // pred_check
      _
    $region3: #{tpu_custom_call.1} parent=1 // pred_check_branch
      %17 = sbr.rel (0) target = $region5
    $region4: #{tpu_custom_call.1} parent=1 // pred_region
      _
    $region5: #{tpu_custom_call.1} parent=1 // pred_fallthru
      _
    // Predicated region
    $region6: #{tpu_custom_call.1} parent=1 // pred_check
      _
    $region7: #{tpu_custom_call.1} parent=1 // pred_check_branch
      %19 = sbr.rel (0) target = $region9
    $region8: #{tpu_custom_call.1} parent=1 // pred_region
      _
    $region9: #{tpu_custom_call.1} parent=1 // pred_fallthru
      _
    // Predicated region
    $region10: #{tpu_custom_call.1} parent=1 // pred_check
      _
    $region11: #{tpu_custom_call.1} parent=1 // pred_check_branch
      %21 = sbr.rel (0) target = $region13
    $region12: #{tpu_custom_call.1} parent=1 // pred_region
      _
    $region13: #{tpu_custom_call.1} parent=1 // pred_fallthru
      _
    // Predicated region
    $region14: #{tpu_custom_call.1} parent=1 // pred_check
      _
    $region15: #{tpu_custom_call.1} parent=1 // pred_check_branch
      %23 = sbr.rel (0) target = $region17
    $region16: #{tpu_custom_call.1} parent=1 // pred_region
      _
    $region17: #{tpu_custom_call.1} parent=1 // pred_fallthru
      _
    // Predicated region
    $region18: #{tpu_custom_call.1} parent=1 // pred_check
      _
    $region19: #{tpu_custom_call.1} parent=1 // pred_check_branch
      %25 = sbr.rel (0) target = $region21
    $region20: #{tpu_custom_call.1} parent=1 // pred_region
      _
    $region21: #{tpu_custom_call.1} parent=1 // pred_fallthru
      _
    // Predicated region
    $region22: #{tpu_custom_call.1} parent=1 // pred_check
      _
    $region23: #{tpu_custom_call.1} parent=1 // pred_check_branch
      %27 = sbr.rel (0) target = $region25
    $region24: #{tpu_custom_call.1} parent=1 // pred_region
      _
    $region25: #{tpu_custom_call.1} parent=1 // pred_fallthru
      _
    // Predicated region
    $region26: #{tpu_custom_call.1} parent=1 // pred_check
      _
    $region27: #{tpu_custom_call.1} parent=1 // pred_check_branch
      %29 = sbr.rel (0) target = $region29
    $region28: #{tpu_custom_call.1} parent=1 // pred_region
      _
    $region29: #{tpu_custom_call.1} parent=1 // pred_fallthru
      _
    // Predicated region
    $region30: #{tpu_custom_call.1} parent=1 // pred_check
      _
    $region31: #{tpu_custom_call.1} parent=1 // pred_check_branch
      %31 = sbr.rel (0) target = $region33
    $region32: #{tpu_custom_call.1} parent=1 // pred_region
      _
    $region33: #{tpu_custom_call.1} parent=1 // pred_fallthru
      _
    // Predicated region
    $region34: #{tpu_custom_call.1} parent=1 // pred_check
      _
    $region35: #{tpu_custom_call.1} parent=1 // pred_check_branch
      %33 = sbr.rel (0) target = $region37
    $region36: #{tpu_custom_call.1} parent=1 // pred_region
      _
    $region37: #{tpu_custom_call.1} parent=1 // pred_fallthru
      _
    // Predicated region
    $region38: #{tpu_custom_call.1} parent=1 // pred_check
      _
    $region39: #{tpu_custom_call.1} parent=1 // pred_check_branch
      %35 = sbr.rel (0) target = $region41
    $region40: #{tpu_custom_call.1} parent=1 // pred_region
      _
    $region41: #{tpu_custom_call.1} parent=1 // pred_fallthru
      _
    %v37 = vld [vmem:[%s0] sm:$0xff]
    %v38 = vld [vmem:[%s0 + $0x8] sm:$0xff]
    %v39 = vld [vmem:[%s0 + $0x10] sm:$0xff]
    %v40 = vld [vmem:[%s0 + $0x18] sm:$0xff]
    %v41 = vld [vmem:[%s0 + $0x20] sm:$0xff]
    %v42 = vld [vmem:[%s0 + $0x28] sm:$0xff]
    %v43 = vld [vmem:[%s0 + $0x30] sm:$0xff]
    %v44 = vld [vmem:[%s0 + $0x38] sm:$0xff]
    %v45 = vpack.c.bf16 %v38, %v37
    %v46 = vpack.c.bf16 %v40, %v39
    %v47 = vpack.c.bf16 %v42, %v41
    %v48 = vpack.c.bf16 %v44, %v43
    %v49 = vld [vmem:[%s1] sm:$0xf]
    %v50 = vld [vmem:[%s1 + $0x4] sm:$0xf]
    %v51 = vld [vmem:[%s1 + $0x8] sm:$0xf]
    %v52 = vld [vmem:[%s1 + $0xc] sm:$0xf]
    %v53 = vld [vmem:[%s1 + $0x10] sm:$0xf]
    %v54 = vld [vmem:[%s1 + $0x14] sm:$0xf]
    %v55 = vld [vmem:[%s1 + $0x18] sm:$0xf]
    %v56 = vld [vmem:[%s1 + $0x1c] sm:$0xf]
    %v57 = vld [vmem:[%s1 + $0x20] sm:$0xf]
    %v58 = vld [vmem:[%s1 + $0x24] sm:$0xf]
    %v59 = vld [vmem:[%s1 + $0x28] sm:$0xf]
    %v60 = vld [vmem:[%s1 + $0x2c] sm:$0xf]
    %v61 = vld [vmem:[%s1 + $0x30] sm:$0xf]
    %v62 = vld [vmem:[%s1 + $0x34] sm:$0xf]
    %v63 = vld [vmem:[%s1 + $0x38] sm:$0xf]
    %v64 = vld [vmem:[%s1 + $0x3c] sm:$0xf]
    %v81 = vunpack.c.l.b16 %v49
    %v82 = vunpack.c.l.b16 %v50
    %v83 = vunpack.c.l.b16 %v51
    %v84 = vunpack.c.l.b16 %v52
    %v85 = vunpack.c.l.b16 %v53
    %v86 = vunpack.c.l.b16 %v54
    %v87 = vunpack.c.l.b16 %v55
    %v88 = vunpack.c.l.b16 %v56
    %v89 = vunpack.c.l.b16 %v57
    %v90 = vunpack.c.l.b16 %v58
    %v91 = vunpack.c.l.b16 %v59
    %v92 = vunpack.c.l.b16 %v60
    %v93 = vunpack.c.l.b16 %v61
    %v94 = vunpack.c.l.b16 %v62
    %v95 = vunpack.c.l.b16 %v63
    %v96 = vunpack.c.l.b16 %v64
    %v97 = vpack.c.b16 %v82, %v81
    %v98 = vpack.c.b16 %v84, %v83
    %v99 = vpack.c.b16 %v86, %v85
    %v100 = vpack.c.b16 %v88, %v87
    %v101 = vpack.c.b16 %v90, %v89
    %v102 = vpack.c.b16 %v92, %v91
    %v103 = vpack.c.b16 %v94, %v93
    %v104 = vpack.c.b16 %v96, %v95
    %113 = vmatprep.subr.bf16.mxu0 0
    %114 = vmatpush1.bf16.msra.mxu0 %v97
    %115 = vmatprep.subr.bf16.mxu0 0
    %116 = vmatpush1.bf16.msra.mxu0 %v98
    %117 = vmatprep.subr.bf16.mxu0 0
    %118 = vmatpush1.bf16.msra.mxu0 %v99
    %119 = vmatprep.subr.bf16.mxu0 0
    %120 = vmatpush1.bf16.msra.mxu0 %v100
    %121 = vmatprep.subr.bf16.mxu0 0
    %122 = vmatpush1.bf16.msra.mxu0 %v101
    %123 = vmatprep.subr.bf16.mxu0 0
    %124 = vmatpush1.bf16.msra.mxu0 %v102
    %125 = vmatprep.subr.bf16.mxu0 0
    %126 = vmatpush1.bf16.msra.mxu0 %v103
    %127 = vmatprep.subr.bf16.mxu0 0
    %128 = vmatpush1.bf16.msra.mxu0 %v104
    %129 = vmatprep.subr.bf16.mxu0 0
    %130 = vmatpush1.bf16.msra.mxu0 0
    %131 = vmatprep.subr.bf16.mxu0 0
    %132 = vmatpush1.bf16.msra.mxu0 0
    %133 = vmatprep.subr.bf16.mxu0 0
    %134 = vmatpush1.bf16.msra.mxu0 0
    %135 = vmatprep.subr.bf16.mxu0 0
    %136 = vmatpush1.bf16.msra.mxu0 0
    %137 = vmatprep.subr.bf16.mxu0 0
    %138 = vmatpush1.bf16.msra.mxu0 0
    %139 = vmatprep.subr.bf16.mxu0 0
    %140 = vmatpush1.bf16.msra.mxu0 0
    %141 = vmatprep.subr.bf16.mxu0 0
    %142 = vmatpush1.bf16.msra.mxu0 0
    %143 = vmatprep.subr.bf16.mxu0 0
    %144 = vmatpush1.bf16.msra.mxu0 0
    %145 = vmatprep.mubr.bf16.mxu0 0
    %146 = vmatmul.mubr.bf16.gmra.mrb[0].mxu0 %v45
    %v147 = vpop.f32.mrb[0].mxu0
    %v148 = vadd.f32 0.0, %v147
    %v149 = vpop.f32.mrb[0].mxu0
    %v150 = vpop.f32.mrb[0].mxu0
    %v151 = vadd.f32 0.0, %v150
    %v152 = vpop.f32.mrb[0].mxu0
    %153 = vmatprep.mubr.bf16.mxu0 0
    %154 = vmatmul.mubr.bf16.gmra.mrb[0].mxu0 %v46
    %v155 = vpop.f32.mrb[0].mxu0
    %v156 = vadd.f32 0.0, %v155
    %v157 = vpop.f32.mrb[0].mxu0
    %v158 = vpop.f32.mrb[0].mxu0
    %v159 = vadd.f32 0.0, %v158
    %v160 = vpop.f32.mrb[0].mxu0
    %161 = vmatprep.mubr.bf16.mxu0 0
    %162 = vmatmul.mubr.bf16.gmra.mrb[0].mxu0 %v47
    %v163 = vpop.f32.mrb[0].mxu0
    %v164 = vadd.f32 0.0, %v163
    %v165 = vpop.f32.mrb[0].mxu0
    %v166 = vpop.f32.mrb[0].mxu0
    %v167 = vadd.f32 0.0, %v166
    %v168 = vpop.f32.mrb[0].mxu0
    %169 = vmatprep.mubr.bf16.mxu0 0
    %170 = vmatmul.mubr.bf16.gmra.mrb[0].mxu0 %v48
    %v171 = vpop.f32.mrb[0].mxu0
    %v172 = vadd.f32 0.0, %v171
    %v173 = vpop.f32.mrb[0].mxu0
    %v174 = vpop.f32.mrb[0].mxu0
    %v175 = vadd.f32 0.0, %v174
    %v176 = vpop.f32.mrb[0].mxu0
    %177 = vdwg.mxu0
    %v178 = vld [vmem:[%s2] sm:$0xf]
    %v179 = vld [vmem:[%s2 + $0x4] sm:$0xf]
    %v180 = vld [vmem:[%s2 + $0x8] sm:$0xf]
    %v181 = vld [vmem:[%s2 + $0xc] sm:$0xf]
    %v182 = vld [vmem:[%s2 + $0x10] sm:$0xf]
    %v183 = vld [vmem:[%s2 + $0x14] sm:$0xf]
    %v184 = vld [vmem:[%s2 + $0x18] sm:$0xf]
    %v185 = vld [vmem:[%s2 + $0x1c] sm:$0xf]
    %v186 = vld [vmem:[%s2 + $0x20] sm:$0xf]
    %v187 = vld [vmem:[%s2 + $0x24] sm:$0xf]
    %v188 = vld [vmem:[%s2 + $0x28] sm:$0xf]
    %v189 = vld [vmem:[%s2 + $0x2c] sm:$0xf]
    %v190 = vld [vmem:[%s2 + $0x30] sm:$0xf]
    %v191 = vld [vmem:[%s2 + $0x34] sm:$0xf]
    %v192 = vld [vmem:[%s2 + $0x38] sm:$0xf]
    %v193 = vld [vmem:[%s2 + $0x3c] sm:$0xf]
    %v210 = vunpack.c.l.b16 %v178
    %v211 = vunpack.c.l.b16 %v179
    %v212 = vunpack.c.l.b16 %v180
    %v213 = vunpack.c.l.b16 %v181
    %v214 = vunpack.c.l.b16 %v182
    %v215 = vunpack.c.l.b16 %v183
    %v216 = vunpack.c.l.b16 %v184
    %v217 = vunpack.c.l.b16 %v185
    %v218 = vunpack.c.l.b16 %v186
    %v219 = vunpack.c.l.b16 %v187
    %v220 = vunpack.c.l.b16 %v188
    %v221 = vunpack.c.l.b16 %v189
    %v222 = vunpack.c.l.b16 %v190
    %v223 = vunpack.c.l.b16 %v191
    %v224 = vunpack.c.l.b16 %v192
    %v225 = vunpack.c.l.b16 %v193
    %v226 = vpack.c.b16 %v211, %v210
    %v227 = vpack.c.b16 %v213, %v212
    %v228 = vpack.c.b16 %v215, %v214
    %v229 = vpack.c.b16 %v217, %v216
    %v230 = vpack.c.b16 %v219, %v218
    %v231 = vpack.c.b16 %v221, %v220
    %v232 = vpack.c.b16 %v223, %v222
    %v233 = vpack.c.b16 %v225, %v224
    %242 = vmatprep.subr.bf16.mxu0 0
    %243 = vmatpush1.bf16.msra.mxu0 %v226
    %244 = vmatprep.subr.bf16.mxu0 0
    %245 = vmatpush1.bf16.msra.mxu0 %v227
    %246 = vmatprep.subr.bf16.mxu0 0
    %247 = vmatpush1.bf16.msra.mxu0 %v228
    %248 = vmatprep.subr.bf16.mxu0 0
    %249 = vmatpush1.bf16.msra.mxu0 %v229
    %250 = vmatprep.subr.bf16.mxu0 0
    %251 = vmatpush1.bf16.msra.mxu0 %v230
    %252 = vmatprep.subr.bf16.mxu0 0
    %253 = vmatpush1.bf16.msra.mxu0 %v231
    %254 = vmatprep.subr.bf16.mxu0 0
    %255 = vmatpush1.bf16.msra.mxu0 %v232
    %256 = vmatprep.subr.bf16.mxu0 0
    %257 = vmatpush1.bf16.msra.mxu0 %v233
    %258 = vmatprep.subr.bf16.mxu0 0
    %259 = vmatpush1.bf16.msra.mxu0 0
    %260 = vmatprep.subr.bf16.mxu0 0
    %261 = vmatpush1.bf16.msra.mxu0 0
    %262 = vmatprep.subr.bf16.mxu0 0
    %263 = vmatpush1.bf16.msra.mxu0 0
    %264 = vmatprep.subr.bf16.mxu0 0
    %265 = vmatpush1.bf16.msra.mxu0 0
    %266 = vmatprep.subr.bf16.mxu0 0
    %267 = vmatpush1.bf16.msra.mxu0 0
    %268 = vmatprep.subr.bf16.mxu0 0
    %269 = vmatpush1.bf16.msra.mxu0 0
    %270 = vmatprep.subr.bf16.mxu0 0
    %271 = vmatpush1.bf16.msra.mxu0 0
    %272 = vmatprep.subr.bf16.mxu0 0
    %273 = vmatpush1.bf16.msra.mxu0 0
    %274 = vmatprep.mubr.bf16.mxu0 0
    %275 = vmatmul.mubr.bf16.gmra.mrb[0].mxu0 %v45
    %v276 = vpop.f32.mrb[0].mxu0
    %v277 = vadd.f32 0.0, %v276
    %v278 = vpop.f32.mrb[0].mxu0
    %v279 = vpop.f32.mrb[0].mxu0
    %v280 = vadd.f32 0.0, %v279
    %v281 = vpop.f32.mrb[0].mxu0
    %282 = vmatprep.mubr.bf16.mxu0 0
    %283 = vmatmul.mubr.bf16.gmra.mrb[0].mxu0 %v46
    %v284 = vpop.f32.mrb[0].mxu0
    %v285 = vadd.f32 0.0, %v284
    %v286 = vpop.f32.mrb[0].mxu0
    %v287 = vpop.f32.mrb[0].mxu0
    %v288 = vadd.f32 0.0, %v287
    %v289 = vpop.f32.mrb[0].mxu0
    %290 = vmatprep.mubr.bf16.mxu0 0
    %291 = vmatmul.mubr.bf16.gmra.mrb[0].mxu0 %v47
    %v292 = vpop.f32.mrb[0].mxu0
    %v293 = vadd.f32 0.0, %v292
    %v294 = vpop.f32.mrb[0].mxu0
    %v295 = vpop.f32.mrb[0].mxu0
    %v296 = vadd.f32 0.0, %v295
    %v297 = vpop.f32.mrb[0].mxu0
    %298 = vmatprep.mubr.bf16.mxu0 0
    %299 = vmatmul.mubr.bf16.gmra.mrb[0].mxu0 %v48
    %v300 = vpop.f32.mrb[0].mxu0
    %v301 = vadd.f32 0.0, %v300
    %v302 = vpop.f32.mrb[0].mxu0
    %v303 = vpop.f32.mrb[0].mxu0
    %v304 = vadd.f32 0.0, %v303
    %v305 = vpop.f32.mrb[0].mxu0
    %306 = vdwg.mxu0
    %v307 = vlaneseq
    %v308 = vshrl.u32 %v307, 7
    %v309 = vadd.s32 %v308, 8
    %v310 = vadd.s32 %v308, 16
    %v311 = vadd.s32 %v308, 24
    %v312 = vadd.s32 %v308, 32
    %v313 = vadd.s32 %v308, 40
    %v314 = vadd.s32 %v308, 48
    %v315 = vadd.s32 %v308, 56
    %vm316 = vcmp.lt.s32.totalorder %v308, 8
    %vm317 = vcmp.lt.s32.totalorder %v309, 8
    %vm318 = vcmp.lt.s32.totalorder %v310, 8
    %vm319 = vcmp.lt.s32.totalorder %v311, 8
    %vm320 = vcmp.lt.s32.totalorder %v312, 8
    %vm321 = vcmp.lt.s32.totalorder %v313, 8
    %vm322 = vcmp.lt.s32.totalorder %v314, 8
    %vm323 = vcmp.lt.s32.totalorder %v315, 8
    %v324 = vsel %vm316, 1, 0
    %v325 = vsel %vm317, 1, 0
    %v326 = vsel %vm318, 1, 0
    %v327 = vsel %vm319, 1, 0
    %v328 = vsel %vm320, 1, 0
    %v329 = vsel %vm321, 1, 0
    %v330 = vsel %vm322, 1, 0
    %v331 = vsel %vm323, 1, 0
    %vm332 = vcmp.eq.s32.totalorder %v324, 1
    %vm333 = vcmp.eq.s32.totalorder %v325, 1
    %vm334 = vcmp.eq.s32.totalorder %v326, 1
    %vm335 = vcmp.eq.s32.totalorder %v327, 1
    %vm336 = vcmp.eq.s32.totalorder %v328, 1
    %vm337 = vcmp.eq.s32.totalorder %v329, 1
    %vm338 = vcmp.eq.s32.totalorder %v330, 1
    %vm339 = vcmp.eq.s32.totalorder %v331, 1
    %v340 = vsel %vm332, 0.0, %v175
    %v341 = vsel %vm333, 0.0, %v148
    %v342 = vsel %vm334, 0.0, %v151
    %v343 = vsel %vm335, 0.0, %v156
    %v344 = vsel %vm336, 0.0, %v159
    %v345 = vsel %vm337, 0.0, %v164
    %v346 = vsel %vm338, 0.0, %v167
    %v347 = vsel %vm339, 0.0, %v172
    %vm348 = vcmp.ge.s32.totalorder %v308, 56
    %vm349 = vcmp.ge.s32.totalorder %v309, 56
    %vm350 = vcmp.ge.s32.totalorder %v310, 56
    %vm351 = vcmp.ge.s32.totalorder %v311, 56
    %vm352 = vcmp.ge.s32.totalorder %v312, 56
    %vm353 = vcmp.ge.s32.totalorder %v313, 56
    %vm354 = vcmp.ge.s32.totalorder %v314, 56
    %vm355 = vcmp.ge.s32.totalorder %v315, 56
    %v356 = vsel %vm348, 1, 0
    %v357 = vsel %vm349, 1, 0
    %v358 = vsel %vm350, 1, 0
    %v359 = vsel %vm351, 1, 0
    %v360 = vsel %vm352, 1, 0
    %v361 = vsel %vm353, 1, 0
    %v362 = vsel %vm354, 1, 0
    %v363 = vsel %vm355, 1, 0
    %vm364 = vcmp.eq.s32.totalorder %v356, 1
    %vm365 = vcmp.eq.s32.totalorder %v357, 1
    %vm366 = vcmp.eq.s32.totalorder %v358, 1
    %vm367 = vcmp.eq.s32.totalorder %v359, 1
    %vm368 = vcmp.eq.s32.totalorder %v360, 1
    %vm369 = vcmp.eq.s32.totalorder %v361, 1
    %vm370 = vcmp.eq.s32.totalorder %v362, 1
    %vm371 = vcmp.eq.s32.totalorder %v363, 1
    %v372 = vsel %vm364, 0.0, %v151
    %v373 = vsel %vm365, 0.0, %v156
    %v374 = vsel %vm366, 0.0, %v159
    %v375 = vsel %vm367, 0.0, %v164
    %v376 = vsel %vm368, 0.0, %v167
    %v377 = vsel %vm369, 0.0, %v172
    %v378 = vsel %vm370, 0.0, %v175
    %v379 = vsel %vm371, 0.0, %v148
    %v380 = vld [vmem:[%s3] sm:$0x1]
    %v381 = vlaneseq
    %v382 = vshrl.u32 %v381, 7
    %v383 = vsub.s32 0, %v382
    %v384 = vrot.slane %v380, %v383
    %v385 = vmul.f32 %v340, %v384
    %v386 = vmul.f32 %v341, %v384
    %v387 = vmul.f32 %v342, %v384
    %v388 = vmul.f32 %v343, %v384
    %v389 = vmul.f32 %v344, %v384
    %v390 = vmul.f32 %v345, %v384
    %v391 = vmul.f32 %v346, %v384
    %v392 = vmul.f32 %v347, %v384
    %v393 = vld [vmem:[%s3 + $0x1] sm:$0x1]
    %v394 = vlaneseq
    %v395 = vshrl.u32 %v394, 7
    %v396 = vsub.s32 0, %v395
    %v397 = vrot.slane %v393, %v396
    %v398 = vmul.f32 %v148, %v397
    %v399 = vmul.f32 %v151, %v397
    %v400 = vmul.f32 %v156, %v397
    %v401 = vmul.f32 %v159, %v397
    %v402 = vmul.f32 %v164, %v397
    %v403 = vmul.f32 %v167, %v397
    %v404 = vmul.f32 %v172, %v397
    %v405 = vmul.f32 %v175, %v397
    %v406 = vadd.f32 %v385, %v398
    %v407 = vadd.f32 %v386, %v399
    %v408 = vadd.f32 %v387, %v400
    %v409 = vadd.f32 %v388, %v401
    %v410 = vadd.f32 %v389, %v402
    %v411 = vadd.f32 %v390, %v403
    %v412 = vadd.f32 %v391, %v404
    %v413 = vadd.f32 %v392, %v405
    %v414 = vld [vmem:[%s3 + $0x2] sm:$0x1]
    %v415 = vlaneseq
    %v416 = vshrl.u32 %v415, 7
    %v417 = vsub.s32 0, %v416
    %v418 = vrot.slane %v414, %v417
    %v419 = vmul.f32 %v372, %v418
    %v420 = vmul.f32 %v373, %v418
    %v421 = vmul.f32 %v374, %v418
    %v422 = vmul.f32 %v375, %v418
    %v423 = vmul.f32 %v376, %v418
    %v424 = vmul.f32 %v377, %v418
    %v425 = vmul.f32 %v378, %v418
    %v426 = vmul.f32 %v379, %v418
    %v427 = vadd.f32 %v406, %v419
    %v428 = vadd.f32 %v407, %v420
    %v429 = vadd.f32 %v408, %v421
    %v430 = vadd.f32 %v409, %v422
    %v431 = vadd.f32 %v410, %v423
    %v432 = vadd.f32 %v411, %v424
    %v433 = vadd.f32 %v412, %v425
    %v434 = vadd.f32 %v413, %v426
    %v435 = vld [vmem:[%s4] sm:$0x1]
    %v437 = vlaneseq
    %v438 = vshrl.u32 %v437, 7
    %v439 = vsub.s32 0, %v438
    %v440 = vrot.slane %v435, %v439
    %v442 = vadd.f32 %v427, %v440
    %v443 = vadd.f32 %v428, %v440
    %v444 = vadd.f32 %v429, %v440
    %v445 = vadd.f32 %v430, %v440
    %v446 = vadd.f32 %v431, %v440
    %v447 = vadd.f32 %v432, %v440
    %v448 = vadd.f32 %v433, %v440
    %v449 = vadd.f32 %v434, %v440
    %v450 = vxor.u32 %v442, 2147483648
    %v451 = vxor.u32 %v443, 2147483648
    %v452 = vxor.u32 %v444, 2147483648
    %v453 = vxor.u32 %v445, 2147483648
    %v454 = vxor.u32 %v446, 2147483648
    %v455 = vxor.u32 %v447, 2147483648
    %v456 = vxor.u32 %v448, 2147483648
    %v457 = vxor.u32 %v449, 2147483648
    %v458 = vmul.f32 %v450, 1.442695
    %v459 = vpow.pop %v458
    %v460 = vmul.f32 %v451, 1.442695
    %v461 = vpow.pop %v460
    %v462 = vmul.f32 %v452, 1.442695
    %v463 = vpow.pop %v462
    %v464 = vmul.f32 %v453, 1.442695
    %v465 = vpow.pop %v464
    %v466 = vmul.f32 %v454, 1.442695
    %v467 = vpow.pop %v466
    %v468 = vmul.f32 %v455, 1.442695
    %v469 = vpow.pop %v468
    %v470 = vmul.f32 %v456, 1.442695
    %v471 = vpow.pop %v470
    %v472 = vmul.f32 %v457, 1.442695
    %v473 = vpow.pop %v472
    %v474 = vadd.f32 %v459, 1.0
    %v475 = vadd.f32 %v461, 1.0
    %v476 = vadd.f32 %v463, 1.0
    %v477 = vadd.f32 %v465, 1.0
    %v478 = vadd.f32 %v467, 1.0
    %v479 = vadd.f32 %v469, 1.0
    %v480 = vadd.f32 %v471, 1.0
    %v481 = vadd.f32 %v473, 1.0
    %v482 = vrcp.pop %v474
    %v483 = vmul.f32 1.0, %v482
    %v484 = vrcp.pop %v475
    %v485 = vmul.f32 1.0, %v484
    %v486 = vrcp.pop %v476
    %v487 = vmul.f32 1.0, %v486
    %v488 = vrcp.pop %v477
    %v489 = vmul.f32 1.0, %v488
    %v490 = vrcp.pop %v478
    %v491 = vmul.f32 1.0, %v490
    %v492 = vrcp.pop %v479
    %v493 = vmul.f32 1.0, %v492
    %v494 = vrcp.pop %v480
    %v495 = vmul.f32 1.0, %v494
    %v496 = vrcp.pop %v481
    %v497 = vmul.f32 1.0, %v496
    %v498 = vmul.f32 %v442, %v483
    %v499 = vmul.f32 %v443, %v485
    %v500 = vmul.f32 %v444, %v487
    %v501 = vmul.f32 %v445, %v489
    %v502 = vmul.f32 %v446, %v491
    %v503 = vmul.f32 %v447, %v493
    %v504 = vmul.f32 %v448, %v495
    %v505 = vmul.f32 %v449, %v497
    %v506 = vpack.c.bf16 %v499, %v498
    %v507 = vpack.c.bf16 %v501, %v500
    %v508 = vpack.c.bf16 %v503, %v502
    %v509 = vpack.c.bf16 %v505, %v504
    %v510 = vld [vmem:[%s5] sm:$0xf]
    %v511 = vld [vmem:[%s5 + $0x4] sm:$0xf]
    %v512 = vld [vmem:[%s5 + $0x8] sm:$0xf]
    %v513 = vld [vmem:[%s5 + $0xc] sm:$0xf]
    %v514 = vld [vmem:[%s5 + $0x10] sm:$0xf]
    %v515 = vld [vmem:[%s5 + $0x14] sm:$0xf]
    %v516 = vld [vmem:[%s5 + $0x18] sm:$0xf]
    %v517 = vld [vmem:[%s5 + $0x1c] sm:$0xf]
    %v526 = vunpack.c.l.b16 %v510
    %v527 = vunpack.c.l.b16 %v511
    %v528 = vunpack.c.l.b16 %v512
    %v529 = vunpack.c.l.b16 %v513
    %v530 = vunpack.c.l.b16 %v514
    %v531 = vunpack.c.l.b16 %v515
    %v532 = vunpack.c.l.b16 %v516
    %v533 = vunpack.c.l.b16 %v517
    %v534 = vpack.c.b16 %v527, %v526
    %v535 = vpack.c.b16 %v529, %v528
    %v536 = vpack.c.b16 %v531, %v530
    %v537 = vpack.c.b16 %v533, %v532
    %vm542 = vcmask 523264
    %v544 = vsel %vm542, %v506, 0
    %v547 = vsel %vm542, %v507, 0
    %v550 = vsel %vm542, %v508, 0
    %v553 = vsel %vm542, %v509, 0
    %555 = vmatprep.subr.bf16.mxu0 0
    %556 = vmatpush1.bf16.msra.mxu0 %v534
    %557 = vmatprep.subr.bf16.mxu0 0
    %558 = vmatpush1.bf16.msra.mxu0 %v535
    %559 = vmatprep.subr.bf16.mxu0 0
    %560 = vmatpush1.bf16.msra.mxu0 %v536
    %561 = vmatprep.subr.bf16.mxu0 0
    %562 = vmatpush1.bf16.msra.mxu0 %v537
    %563 = vmatprep.subr.bf16.mxu0 0
    %564 = vmatpush1.bf16.msra.mxu0 0
    %565 = vmatprep.subr.bf16.mxu0 0
    %566 = vmatpush1.bf16.msra.mxu0 0
    %567 = vmatprep.subr.bf16.mxu0 0
    %568 = vmatpush1.bf16.msra.mxu0 0
    %569 = vmatprep.subr.bf16.mxu0 0
    %570 = vmatpush1.bf16.msra.mxu0 0
    %571 = vmatprep.subr.bf16.mxu0 0
    %572 = vmatpush1.bf16.msra.mxu0 0
    %573 = vmatprep.subr.bf16.mxu0 0
    %574 = vmatpush1.bf16.msra.mxu0 0
    %575 = vmatprep.subr.bf16.mxu0 0
    %576 = vmatpush1.bf16.msra.mxu0 0
    %577 = vmatprep.subr.bf16.mxu0 0
    %578 = vmatpush1.bf16.msra.mxu0 0
    %579 = vmatprep.subr.bf16.mxu0 0
    %580 = vmatpush1.bf16.msra.mxu0 0
    %581 = vmatprep.subr.bf16.mxu0 0
    %582 = vmatpush1.bf16.msra.mxu0 0
    %583 = vmatprep.subr.bf16.mxu0 0
    %584 = vmatpush1.bf16.msra.mxu0 0
    %585 = vmatprep.subr.bf16.mxu0 0
    %586 = vmatpush1.bf16.msra.mxu0 0
    %587 = vmatprep.mubr.bf16.mxu0 0
    %588 = vmatmul.mubr.bf16.gmra.mrb[0].mxu0 %v544
    %v589 = vpop.f32.mrb[0].mxu0
    %v590 = vadd.f32 0.0, %v589
    %v591 = vpop.f32.mrb[0].mxu0
    %v592 = vpop.f32.mrb[0].mxu0
    %v593 = vadd.f32 0.0, %v592
    %v594 = vpop.f32.mrb[0].mxu0
    %595 = vmatprep.mubr.bf16.mxu0 0
    %596 = vmatmul.mubr.bf16.gmra.mrb[0].mxu0 %v547
    %v597 = vpop.f32.mrb[0].mxu0
    %v598 = vadd.f32 0.0, %v597
    %v599 = vpop.f32.mrb[0].mxu0
    %v600 = vpop.f32.mrb[0].mxu0
    %v601 = vadd.f32 0.0, %v600
    %v602 = vpop.f32.mrb[0].mxu0
    %603 = vmatprep.mubr.bf16.mxu0 0
    %604 = vmatmul.mubr.bf16.gmra.mrb[0].mxu0 %v550
    %v605 = vpop.f32.mrb[0].mxu0
    %v606 = vadd.f32 0.0, %v605
    %v607 = vpop.f32.mrb[0].mxu0
    %v608 = vpop.f32.mrb[0].mxu0
    %v609 = vadd.f32 0.0, %v608
    %v610 = vpop.f32.mrb[0].mxu0
    %611 = vmatprep.mubr.bf16.mxu0 0
    %612 = vmatmul.mubr.bf16.gmra.mrb[0].mxu0 %v553
    %v613 = vpop.f32.mrb[0].mxu0
    %v614 = vadd.f32 0.0, %v613
    %v615 = vpop.f32.mrb[0].mxu0
    %v616 = vpop.f32.mrb[0].mxu0
    %v617 = vadd.f32 0.0, %v616
    %v618 = vpop.f32.mrb[0].mxu0
    %619 = vdwg.mxu0
    %vm620 = vcmask 130048
    %621 = vst.msk [vmem:[#allocation2] sm:$0xff] %vm620, %v590
    %622 = vst.msk [vmem:[#allocation2 + $0x8] sm:$0xff] %vm620, %v593
    %623 = vst.msk [vmem:[#allocation2 + $0x10] sm:$0xff] %vm620, %v598
    %624 = vst.msk [vmem:[#allocation2 + $0x18] sm:$0xff] %vm620, %v601
    %625 = vst.msk [vmem:[#allocation2 + $0x20] sm:$0xff] %vm620, %v606
    %626 = vst.msk [vmem:[#allocation2 + $0x28] sm:$0xff] %vm620, %v609
    %627 = vst.msk [vmem:[#allocation2 + $0x30] sm:$0xff] %vm620, %v614
    %628 = vst.msk [vmem:[#allocation2 + $0x38] sm:$0xff] %vm620, %v617
    %v629 = vld [vmem:[%s6] sm:$0xf]
    %v630 = vld [vmem:[%s6 + $0x4] sm:$0xf]
    %v631 = vld [vmem:[%s6 + $0x8] sm:$0xf]
    %v632 = vld [vmem:[%s6 + $0xc] sm:$0xf]
    %v633 = vld [vmem:[%s6 + $0x10] sm:$0xf]
    %v634 = vld [vmem:[%s6 + $0x14] sm:$0xf]
    %v635 = vld [vmem:[%s6 + $0x18] sm:$0xf]
    %v636 = vld [vmem:[%s6 + $0x1c] sm:$0xf]
    %v645 = vunpack.c.l.b16 %v629
    %v646 = vunpack.c.l.b16 %v630
    %v647 = vunpack.c.l.b16 %v631
    %v648 = vunpack.c.l.b16 %v632
    %v649 = vunpack.c.l.b16 %v633
    %v650 = vunpack.c.l.b16 %v634
    %v651 = vunpack.c.l.b16 %v635
    %v652 = vunpack.c.l.b16 %v636
    %v653 = vpack.c.b16 %v646, %v645
    %v654 = vpack.c.b16 %v648, %v647
    %v655 = vpack.c.b16 %v650, %v649
    %v656 = vpack.c.b16 %v652, %v651
    %661 = vmatprep.subr.bf16.mxu0 0
    %662 = vmatpush1.bf16.msra.mxu0 %v653
    %663 = vmatprep.subr.bf16.mxu0 0
    %664 = vmatpush1.bf16.msra.mxu0 %v654
    %665 = vmatprep.subr.bf16.mxu0 0
    %666 = vmatpush1.bf16.msra.mxu0 %v655
    %667 = vmatprep.subr.bf16.mxu0 0
    %668 = vmatpush1.bf16.msra.mxu0 %v656
    %669 = vmatprep.subr.bf16.mxu0 0
    %670 = vmatpush1.bf16.msra.mxu0 0
    %671 = vmatprep.subr.bf16.mxu0 0
    %672 = vmatpush1.bf16.msra.mxu0 0
    %673 = vmatprep.subr.bf16.mxu0 0
    %674 = vmatpush1.bf16.msra.mxu0 0
    %675 = vmatprep.subr.bf16.mxu0 0
    %676 = vmatpush1.bf16.msra.mxu0 0
    %677 = vmatprep.subr.bf16.mxu0 0
    %678 = vmatpush1.bf16.msra.mxu0 0
    %679 = vmatprep.subr.bf16.mxu0 0
    %680 = vmatpush1.bf16.msra.mxu0 0
    %681 = vmatprep.subr.bf16.mxu0 0
    %682 = vmatpush1.bf16.msra.mxu0 0
    %683 = vmatprep.subr.bf16.mxu0 0
    %684 = vmatpush1.bf16.msra.mxu0 0
    %685 = vmatprep.subr.bf16.mxu0 0
    %686 = vmatpush1.bf16.msra.mxu0 0
    %687 = vmatprep.subr.bf16.mxu0 0
    %688 = vmatpush1.bf16.msra.mxu0 0
    %689 = vmatprep.subr.bf16.mxu0 0
    %690 = vmatpush1.bf16.msra.mxu0 0
    %691 = vmatprep.subr.bf16.mxu0 0
    %692 = vmatpush1.bf16.msra.mxu0 0
    %693 = vmatprep.mubr.bf16.mxu0 0
    %694 = vmatmul.mubr.bf16.gmra.mrb[0].mxu0 %v544
    %v695 = vpop.f32.mrb[0].mxu0
    %v696 = vadd.f32 0.0, %v695
    %v697 = vpop.f32.mrb[0].mxu0
    %v698 = vpop.f32.mrb[0].mxu0
    %v699 = vadd.f32 0.0, %v698
    %v700 = vpop.f32.mrb[0].mxu0
    %701 = vmatprep.mubr.bf16.mxu0 0
    %702 = vmatmul.mubr.bf16.gmra.mrb[0].mxu0 %v547
    %v703 = vpop.f32.mrb[0].mxu0
    %v704 = vadd.f32 0.0, %v703
    %v705 = vpop.f32.mrb[0].mxu0
    %v706 = vpop.f32.mrb[0].mxu0
    %v707 = vadd.f32 0.0, %v706
    %v708 = vpop.f32.mrb[0].mxu0
    %709 = vmatprep.mubr.bf16.mxu0 0
    %710 = vmatmul.mubr.bf16.gmra.mrb[0].mxu0 %v550
    %v711 = vpop.f32.mrb[0].mxu0
    %v712 = vadd.f32 0.0, %v711
    %v713 = vpop.f32.mrb[0].mxu0
    %v714 = vpop.f32.mrb[0].mxu0
    %v715 = vadd.f32 0.0, %v714
    %v716 = vpop.f32.mrb[0].mxu0
    %717 = vmatprep.mubr.bf16.mxu0 0
    %718 = vmatmul.mubr.bf16.gmra.mrb[0].mxu0 %v553
    %v719 = vpop.f32.mrb[0].mxu0
    %v720 = vadd.f32 0.0, %v719
    %v721 = vpop.f32.mrb[0].mxu0
    %v722 = vpop.f32.mrb[0].mxu0
    %v723 = vadd.f32 0.0, %v722
    %v724 = vpop.f32.mrb[0].mxu0
    %725 = vdwg.mxu0
    %v726 = vld [vmem:[%s7] sm:$0x1]
    %v727 = vmax.f32 %v726, 0.0
    %vm728 = vcmp.ne.f32.partialorder %v726, %v726
    %v729 = vadd.f32 %v726, 0.0
    %v730 = vand.u32 2147483647, %v726
    %v731 = vsub.f32 0.0, %v730
    %v732 = vmul.f32 %v731, 1.442695
    %v733 = vpow.pop %v732
    %v734 = vadd.f32 %v733, 1.0
    %v735 = vlog2.pop %v734
    %v736 = vmul.f32 %v735, 0.6931472
    %v737 = vmul.f32 -0.5, %v733
    %v738 = vadd.f32 %v737, 1.0
    %v739 = vmul.f32 %v738, %v733
    %v740 = vand.u32 2147483647, %v733
    %vm741 = vcmp.lt.f32.partialorder %v740, 0.0004427343
    %v742 = vsel %vm741, %v739, %v736
    %v743 = vadd.f32 %v727, %v742
    %v744 = vsel %vm728, %v729, %v743
    %v745 = vsub.f32 0.0, %v744
    %v746 = vmul.f32 %v745, 1.442695
    %v747 = vpow.pop %v746
    %v749 = vlaneseq
    %v750 = vshrl.u32 %v749, 7
    %v751 = vsub.s32 0, %v750
    %v752 = vrot.slane %v747, %v751
    %v754 = vmul.f32 %v752, 0.0
    %v755 = vld [vmem:[#allocation2] sm:$0xff]
    %v756 = vadd.f32 %v754, %v755
    %757 = vst.msk [vmem:[#allocation3] sm:$0xff] %vm620, %v756
    %v758 = vmul.f32 %v756, %v752
    %s759 = scalar_lea.vmem [#allocation2], 8
    %v760 = vld [vmem:[%s759] sm:$0xff]
    %v761 = vadd.f32 %v758, %v760
    %s762 = scalar_lea.vmem [#allocation3], 8
    %763 = vst.msk [vmem:[%s762] sm:$0xff] %vm620, %v761
    %v764 = vmul.f32 %v761, %v752
    %s765 = scalar_lea.vmem [#allocation2], 16
    %v766 = vld [vmem:[%s765] sm:$0xff]
    %v767 = vadd.f32 %v764, %v766
    %s768 = scalar_lea.vmem [#allocation3], 16
    %769 = vst.msk [vmem:[%s768] sm:$0xff] %vm620, %v767
    %v770 = vmul.f32 %v767, %v752
    %s771 = scalar_lea.vmem [#allocation2], 24
    %v772 = vld [vmem:[%s771] sm:$0xff]
    %v773 = vadd.f32 %v770, %v772
    %s774 = scalar_lea.vmem [#allocation3], 24
    %775 = vst.msk [vmem:[%s774] sm:$0xff] %vm620, %v773
    %v776 = vmul.f32 %v773, %v752
    %s777 = scalar_lea.vmem [#allocation2], 32
    %v778 = vld [vmem:[%s777] sm:$0xff]
    %v779 = vadd.f32 %v776, %v778
    %s780 = scalar_lea.vmem [#allocation3], 32
    %781 = vst.msk [vmem:[%s780] sm:$0xff] %vm620, %v779
    %v782 = vmul.f32 %v779, %v752
    %s783 = scalar_lea.vmem [#allocation2], 40
    %v784 = vld [vmem:[%s783] sm:$0xff]
    %v785 = vadd.f32 %v782, %v784
    %s786 = scalar_lea.vmem [#allocation3], 40
    %787 = vst.msk [vmem:[%s786] sm:$0xff] %vm620, %v785
    %v788 = vmul.f32 %v785, %v752
    %s789 = scalar_lea.vmem [#allocation2], 48
    %v790 = vld [vmem:[%s789] sm:$0xff]
    %v791 = vadd.f32 %v788, %v790
    %s792 = scalar_lea.vmem [#allocation3], 48
    %793 = vst.msk [vmem:[%s792] sm:$0xff] %vm620, %v791
    %v794 = vmul.f32 %v791, %v752
    %s795 = scalar_lea.vmem [#allocation2], 56
    %v796 = vld [vmem:[%s795] sm:$0xff]
    %v797 = vadd.f32 %v794, %v796
    %s798 = scalar_lea.vmem [#allocation3], 56
    %799 = vst.msk [vmem:[%s798] sm:$0xff] %vm620, %v797
    %v800 = vld [vmem:[#allocation3] sm:$0xff]
    %v801 = vld [vmem:[#allocation3 + $0x8] sm:$0xff]
    %v802 = vld [vmem:[#allocation3 + $0x10] sm:$0xff]
    %v803 = vld [vmem:[#allocation3 + $0x18] sm:$0xff]
    %v804 = vld [vmem:[#allocation3 + $0x20] sm:$0xff]
    %v805 = vld [vmem:[#allocation3 + $0x28] sm:$0xff]
    %v806 = vld [vmem:[#allocation3 + $0x30] sm:$0xff]
    %v807 = vld [vmem:[#allocation3 + $0x38] sm:$0xff]
    %v808 = vmul.f32 %v800, %v696
    %v809 = vmul.f32 %v801, %v699
    %v810 = vmul.f32 %v802, %v704
    %v811 = vmul.f32 %v803, %v707
    %v812 = vmul.f32 %v804, %v712
    %v813 = vmul.f32 %v805, %v715
    %v814 = vmul.f32 %v806, %v720
    %v815 = vmul.f32 %v807, %v723
    %v816 = vsel %vm620, %v808, 0.0
    %817 = vadd.xlane.f32.xlu0 %v816
    %v818 = vpop.xlane.xlu0 %817
    %v819 = vsel %vm620, %v809, 0.0
    %820 = vadd.xlane.f32.xlu0 %v819
    %v821 = vpop.xlane.xlu0 %820
    %v822 = vsel %vm620, %v810, 0.0
    %823 = vadd.xlane.f32.xlu0 %v822
    %v824 = vpop.xlane.xlu0 %823
    %v825 = vsel %vm620, %v811, 0.0
    %826 = vadd.xlane.f32.xlu0 %v825
    %v827 = vpop.xlane.xlu0 %826
    %v828 = vsel %vm620, %v812, 0.0
    %829 = vadd.xlane.f32.xlu0 %v828
    %v830 = vpop.xlane.xlu0 %829
    %v831 = vsel %vm620, %v813, 0.0
    %832 = vadd.xlane.f32.xlu0 %v831
    %v833 = vpop.xlane.xlu0 %832
    %v834 = vsel %vm620, %v814, 0.0
    %835 = vadd.xlane.f32.xlu0 %v834
    %v836 = vpop.xlane.xlu0 %835
    %v837 = vsel %vm620, %v815, 0.0
    %838 = vadd.xlane.f32.xlu0 %v837
    %v839 = vpop.xlane.xlu0 %838
    %v840 = vld [vmem:[%s8] sm:$0x1]
    %v842 = vlaneseq
    %v843 = vshrl.u32 %v842, 7
    %v844 = vsub.s32 0, %v843
    %v845 = vrot.slane %v840, %v844
    %v847 = vmul.f32 %v498, %v845
    %v848 = vmul.f32 %v499, %v845
    %v849 = vmul.f32 %v500, %v845
    %v850 = vmul.f32 %v501, %v845
    %v851 = vmul.f32 %v502, %v845
    %v852 = vmul.f32 %v503, %v845
    %v853 = vmul.f32 %v504, %v845
    %v854 = vmul.f32 %v505, %v845
    %v855 = vadd.f32 %v818, %v847
    %v856 = vadd.f32 %v821, %v848
    %v857 = vadd.f32 %v824, %v849
    %v858 = vadd.f32 %v827, %v850
    %v859 = vadd.f32 %v830, %v851
    %v860 = vadd.f32 %v833, %v852
    %v861 = vadd.f32 %v836, %v853
    %v862 = vadd.f32 %v839, %v854
    %v863 = vxor.u32 %v277, 2147483648
    %v864 = vxor.u32 %v280, 2147483648
    %v865 = vxor.u32 %v285, 2147483648
    %v866 = vxor.u32 %v288, 2147483648
    %v867 = vxor.u32 %v293, 2147483648
    %v868 = vxor.u32 %v296, 2147483648
    %v869 = vxor.u32 %v301, 2147483648
    %v870 = vxor.u32 %v304, 2147483648
    %v871 = vmul.f32 %v863, 1.442695
    %v872 = vpow.pop %v871
    %v873 = vmul.f32 %v864, 1.442695
    %v874 = vpow.pop %v873
    %v875 = vmul.f32 %v865, 1.442695
    %v876 = vpow.pop %v875
    %v877 = vmul.f32 %v866, 1.442695
    %v878 = vpow.pop %v877
    %v879 = vmul.f32 %v867, 1.442695
    %v880 = vpow.pop %v879
    %v881 = vmul.f32 %v868, 1.442695
    %v882 = vpow.pop %v881
    %v883 = vmul.f32 %v869, 1.442695
    %v884 = vpow.pop %v883
    %v885 = vmul.f32 %v870, 1.442695
    %v886 = vpow.pop %v885
    %v887 = vadd.f32 %v872, 1.0
    %v888 = vadd.f32 %v874, 1.0
    %v889 = vadd.f32 %v876, 1.0
    %v890 = vadd.f32 %v878, 1.0
    %v891 = vadd.f32 %v880, 1.0
    %v892 = vadd.f32 %v882, 1.0
    %v893 = vadd.f32 %v884, 1.0
    %v894 = vadd.f32 %v886, 1.0
    %v895 = vrcp.pop %v887
    %v896 = vmul.f32 1.0, %v895
    %v897 = vrcp.pop %v888
    %v898 = vmul.f32 1.0, %v897
    %v899 = vrcp.pop %v889
    %v900 = vmul.f32 1.0, %v899
    %v901 = vrcp.pop %v890
    %v902 = vmul.f32 1.0, %v901
    %v903 = vrcp.pop %v891
    %v904 = vmul.f32 1.0, %v903
    %v905 = vrcp.pop %v892
    %v906 = vmul.f32 1.0, %v905
    %v907 = vrcp.pop %v893
    %v908 = vmul.f32 1.0, %v907
    %v909 = vrcp.pop %v894
    %v910 = vmul.f32 1.0, %v909
    %v911 = vmul.f32 %v277, %v896
    %v912 = vmul.f32 %v280, %v898
    %v913 = vmul.f32 %v285, %v900
    %v914 = vmul.f32 %v288, %v902
    %v915 = vmul.f32 %v293, %v904
    %v916 = vmul.f32 %v296, %v906
    %v917 = vmul.f32 %v301, %v908
    %v918 = vmul.f32 %v304, %v910
    %v919 = vmul.f32 %v855, %v911
    %v920 = vmul.f32 %v856, %v912
    %v921 = vmul.f32 %v857, %v913
    %v922 = vmul.f32 %v858, %v914
    %v923 = vmul.f32 %v859, %v915
    %v924 = vmul.f32 %v860, %v916
    %v925 = vmul.f32 %v861, %v917
    %v926 = vmul.f32 %v862, %v918
    %v927 = vpack.c.bf16 %v920, %v919
    %v928 = vpack.c.bf16 %v922, %v921
    %v929 = vpack.c.bf16 %v924, %v923
    %v930 = vpack.c.bf16 %v926, %v925
    %v931 = vld [vmem:[%s9] sm:$0xf]
    %v932 = vld [vmem:[%s9 + $0x4] sm:$0xf]
    %v933 = vld [vmem:[%s9 + $0x8] sm:$0xf]
    %v934 = vld [vmem:[%s9 + $0xc] sm:$0xf]
    %v935 = vld [vmem:[%s9 + $0x10] sm:$0xf]
    %v936 = vld [vmem:[%s9 + $0x14] sm:$0xf]
    %v937 = vld [vmem:[%s9 + $0x18] sm:$0xf]
    %v938 = vld [vmem:[%s9 + $0x1c] sm:$0xf]
    %v947 = vunpack.c.l.b16 %v931
    %v948 = vunpack.c.l.b16 %v932
    %v949 = vunpack.c.l.b16 %v933
    %v950 = vunpack.c.l.b16 %v934
    %v951 = vunpack.c.l.b16 %v935
    %v952 = vunpack.c.l.b16 %v936
    %v953 = vunpack.c.l.b16 %v937
    %v954 = vunpack.c.l.b16 %v938
    %v955 = vpack.c.b16 %v948, %v947
    %v956 = vpack.c.b16 %v950, %v949
    %v957 = vpack.c.b16 %v952, %v951
    %v958 = vpack.c.b16 %v954, %v953
    %v964 = vsel %vm542, %v927, 0
    %v967 = vsel %vm542, %v928, 0
    %v970 = vsel %vm542, %v929, 0
    %v973 = vsel %vm542, %v930, 0
    %975 = vmatprep.subr.bf16.mxu0 0
    %976 = vmatpush1.bf16.msra.mxu0 %v955
    %977 = vmatprep.subr.bf16.mxu0 0
    %978 = vmatpush1.bf16.msra.mxu0 %v956
    %979 = vmatprep.subr.bf16.mxu0 0
    %980 = vmatpush1.bf16.msra.mxu0 %v957
    %981 = vmatprep.subr.bf16.mxu0 0
    %982 = vmatpush1.bf16.msra.mxu0 %v958
    %983 = vmatprep.subr.bf16.mxu0 0
    %984 = vmatpush1.bf16.msra.mxu0 0
    %985 = vmatprep.subr.bf16.mxu0 0
    %986 = vmatpush1.bf16.msra.mxu0 0
    %987 = vmatprep.subr.bf16.mxu0 0
    %988 = vmatpush1.bf16.msra.mxu0 0
    %989 = vmatprep.subr.bf16.mxu0 0
    %990 = vmatpush1.bf16.msra.mxu0 0
    %991 = vmatprep.subr.bf16.mxu0 0
    %992 = vmatpush1.bf16.msra.mxu0 0
    %993 = vmatprep.subr.bf16.mxu0 0
    %994 = vmatpush1.bf16.msra.mxu0 0
    %995 = vmatprep.subr.bf16.mxu0 0
    %996 = vmatpush1.bf16.msra.mxu0 0
    %997 = vmatprep.subr.bf16.mxu0 0
    %998 = vmatpush1.bf16.msra.mxu0 0
    %999 = vmatprep.subr.bf16.mxu0 0
    %1000 = vmatpush1.bf16.msra.mxu0 0
    %1001 = vmatprep.subr.bf16.mxu0 0
    %1002 = vmatpush1.bf16.msra.mxu0 0
    %1003 = vmatprep.subr.bf16.mxu0 0
    %1004 = vmatpush1.bf16.msra.mxu0 0
    %1005 = vmatprep.subr.bf16.mxu0 0
    %1006 = vmatpush1.bf16.msra.mxu0 0
    %1007 = vmatprep.mubr.bf16.mxu0 0
    %1008 = vmatmul.mubr.bf16.gmra.mrb[0].mxu0 %v964
    %v1009 = vpop.f32.mrb[0].mxu0
    %v1010 = vadd.f32 0.0, %v1009
    %v1011 = vpop.f32.mrb[0].mxu0
    %v1012 = vpop.f32.mrb[0].mxu0
    %v1013 = vadd.f32 0.0, %v1012
    %v1014 = vpop.f32.mrb[0].mxu0
    %1015 = vmatprep.mubr.bf16.mxu0 0
    %1016 = vmatmul.mubr.bf16.gmra.mrb[0].mxu0 %v967
    %v1017 = vpop.f32.mrb[0].mxu0
    %v1018 = vadd.f32 0.0, %v1017
    %v1019 = vpop.f32.mrb[0].mxu0
    %v1020 = vpop.f32.mrb[0].mxu0
    %v1021 = vadd.f32 0.0, %v1020
    %v1022 = vpop.f32.mrb[0].mxu0
    %1023 = vmatprep.mubr.bf16.mxu0 0
    %1024 = vmatmul.mubr.bf16.gmra.mrb[0].mxu0 %v970
    %v1025 = vpop.f32.mrb[0].mxu0
    %v1026 = vadd.f32 0.0, %v1025
    %v1027 = vpop.f32.mrb[0].mxu0
    %v1028 = vpop.f32.mrb[0].mxu0
    %v1029 = vadd.f32 0.0, %v1028
    %v1030 = vpop.f32.mrb[0].mxu0
    %1031 = vmatprep.mubr.bf16.mxu0 0
    %1032 = vmatmul.mubr.bf16.gmra.mrb[0].mxu0 %v973
    %v1033 = vpop.f32.mrb[0].mxu0
    %v1034 = vadd.f32 0.0, %v1033
    %v1035 = vpop.f32.mrb[0].mxu0
    %v1036 = vpop.f32.mrb[0].mxu0
    %v1037 = vadd.f32 0.0, %v1036
    %v1038 = vpop.f32.mrb[0].mxu0
    %1039 = vdwg.mxu0
    %1040 = vst [vmem:[#allocation4] sm:$0xff] %v1010
    %1041 = vst [vmem:[#allocation4 + $0x8] sm:$0xff] %v1013
    %1042 = vst [vmem:[#allocation4 + $0x10] sm:$0xff] %v1018
    %1043 = vst [vmem:[#allocation4 + $0x18] sm:$0xff] %v1021
    %1044 = vst [vmem:[#allocation4 + $0x20] sm:$0xff] %v1026
    %1045 = vst [vmem:[#allocation4 + $0x28] sm:$0xff] %v1029
    %1046 = vst [vmem:[#allocation4 + $0x30] sm:$0xff] %v1034
    %1047 = vst [vmem:[#allocation4 + $0x38] sm:$0xff] %v1037
    // Predicated region
    $region42: #{tpu_custom_call.1} parent=1 // pred_check
      _
    $region43: #{tpu_custom_call.1} parent=1 // pred_check_branch
      %1049 = sbr.rel (0) target = $region45
    $region44: #{tpu_custom_call.1} parent=1 // pred_region
      %s1051 = ssub.s32 1024, 1024
      %1052 = vsyncadd [#allocation5], %s1051
      %s1053 = sshll.u32 [#allocation4], 4
      %s1054 = int_to_ptr.vmem [resolvable:$true] %s1053
      %1059 = dma.vmem_to_hbm [thread:$0]  %s1054, 1024, %s10, [#allocation5], 128, 128, 8
    $region45: #{tpu_custom_call.1} parent=1 // pred_fallthru
      _
    // Predicated region
    $region46: #{tpu_custom_call.1} parent=1 // pred_check
      _
    $region47: #{tpu_custom_call.1} parent=1 // pred_check_branch
      %1061 = sbr.rel (0) target = $region49
    $region48: #{tpu_custom_call.1} parent=1 // pred_region
      %1062 = dma.done [#allocation5], 1024
    $region49: #{tpu_custom_call.1} parent=1 // pred_fallthru
      _
    %1063 = vsyncpa [#allocation5], 1

// kernel: tpu_custom_call.1
$region0: #{tpu_custom_call.1}
  #allocation0 [shape = 'u32[]', space=smem, size = 0x4, offset = 0x4, fixed_abs, tag = 'smem constant byte address 0x4 - core index']
  #allocation1 [shape = 'u32[144,128]{1,0:T(1,128)}', space=vmem, size = 0x12000, scoped, tag = 'internal scratch']
  #allocation2 [shape = 'f32[64,16]{1,0:T(8,128)}', space=vmem, size = 0x8000, scoped, tag = 'scratch operand']
  #allocation3 [shape = 'f32[64,16]{1,0:T(8,128)}', space=vmem, size = 0x8000, scoped, tag = 'scratch operand']
  %s0 = inlined_call_operand.vmem [shape: f32[64,128], index: 0, kind: input, shape index: {}]
  %s1 = inlined_call_operand.vmem [shape: bf16[128,64], index: 1, kind: input, shape index: {}]
  %s2 = inlined_call_operand.vmem [shape: bf16[128,64], index: 2, kind: input, shape index: {}]
  %s3 = inlined_call_operand.vmem [shape: f32[3,64], index: 3, kind: input, shape index: {}]
  %s4 = inlined_call_operand.vmem [shape: f32[1,64], index: 4, kind: input, shape index: {}]
  %s5 = inlined_call_operand.vmem [shape: bf16[64,16], index: 5, kind: input, shape index: {}]
  %s6 = inlined_call_operand.vmem [shape: bf16[64,16], index: 6, kind: input, shape index: {}]
  %s7 = inlined_call_operand.vmem [shape: f32[1,16], index: 7, kind: input, shape index: {}]
  %s8 = inlined_call_operand.vmem [shape: f32[1,64], index: 8, kind: input, shape index: {}]
  %s9 = inlined_call_operand.vmem [shape: bf16[64,128], index: 9, kind: input, shape index: {}]
  %s10 = inlined_call_operand.hbm [shape: f32[64,128], index: 10, kind: output, shape index: {}]
  %s11 = sld [smem:[#allocation0]]
  $region50: #{tpu_custom_call.1} parent=0
    _
  %s13 = ssub.s32 1, %s11
  %s14 = scalar_select 0, %s13, %s11
  $region1: #{tpu_custom_call.1} parent=0
    #allocation4 [shape = 'u8[32768]{0}', space=vmem, size = 0x8000, scoped, tag = 'output window, operand 0, single buffered']
    #allocation5 [shape = 's32[1]{0}', space=sflag, size = 0x4, scoped, tag = 'scoped memory for tpu_custom_call.1']
    %15 = vsyncpa [#allocation5], 0
    // Predicated region
    $region2: #{tpu_custom_call.1} parent=1 // pred_check
      _
    $region3: #{tpu_custom_call.1} parent=1 // pred_check_branch
      %17 = sbr.rel (0) target = $region5
    $region4: #{tpu_custom_call.1} parent=1 // pred_region
      _
    $region5: #{tpu_custom_call.1} parent=1 // pred_fallthru
      _
    // Predicated region
    $region6: #{tpu_custom_call.1} parent=1 // pred_check
      _
    $region7: #{tpu_custom_call.1} parent=1 // pred_check_branch
      %19 = sbr.rel (0) target = $region9
    $region8: #{tpu_custom_call.1} parent=1 // pred_region
      _
    $region9: #{tpu_custom_call.1} parent=1 // pred_fallthru
      _
    // Predicated region
    $region10: #{tpu_custom_call.1} parent=1 // pred_check
      _
    $region11: #{tpu_custom_call.1} parent=1 // pred_check_branch
      %21 = sbr.rel (0) target = $region13
    $region12: #{tpu_custom_call.1} parent=1 // pred_region
      _
    $region13: #{tpu_custom_call.1} parent=1 // pred_fallthru
      _
    // Predicated region
    $region14: #{tpu_custom_call.1} parent=1 // pred_check
      _
    $region15: #{tpu_custom_call.1} parent=1 // pred_check_branch
      %23 = sbr.rel (0) target = $region17
    $region16: #{tpu_custom_call.1} parent=1 // pred_region
      _
    $region17: #{tpu_custom_call.1} parent=1 // pred_fallthru
      _
    // Predicated region
    $region18: #{tpu_custom_call.1} parent=1 // pred_check
      _
    $region19: #{tpu_custom_call.1} parent=1 // pred_check_branch
      %25 = sbr.rel (0) target = $region21
    $region20: #{tpu_custom_call.1} parent=1 // pred_region
      _
    $region21: #{tpu_custom_call.1} parent=1 // pred_fallthru
      _
    // Predicated region
    $region22: #{tpu_custom_call.1} parent=1 // pred_check
      _
    $region23: #{tpu_custom_call.1} parent=1 // pred_check_branch
      %27 = sbr.rel (0) target = $region25
    $region24: #{tpu_custom_call.1} parent=1 // pred_region
      _
    $region25: #{tpu_custom_call.1} parent=1 // pred_fallthru
      _
    // Predicated region
    $region26: #{tpu_custom_call.1} parent=1 // pred_check
      _
    $region27: #{tpu_custom_call.1} parent=1 // pred_check_branch
      %29 = sbr.rel (0) target = $region29
    $region28: #{tpu_custom_call.1} parent=1 // pred_region
      _
    $region29: #{tpu_custom_call.1} parent=1 // pred_fallthru
      _
    // Predicated region
    $region30: #{tpu_custom_call.1} parent=1 // pred_check
      _
    $region31: #{tpu_custom_call.1} parent=1 // pred_check_branch
      %31 = sbr.rel (0) target = $region33
    $region32: #{tpu_custom_call.1} parent=1 // pred_region
      _
    $region33: #{tpu_custom_call.1} parent=1 // pred_fallthru
      _
    // Predicated region
    $region34: #{tpu_custom_call.1} parent=1 // pred_check
      _
    $region35: #{tpu_custom_call.1} parent=1 // pred_check_branch
      %33 = sbr.rel (0) target = $region37
    $region36: #{tpu_custom_call.1} parent=1 // pred_region
      _
    $region37: #{tpu_custom_call.1} parent=1 // pred_fallthru
      _
    // Predicated region
    $region38: #{tpu_custom_call.1} parent=1 // pred_check
      _
    $region39: #{tpu_custom_call.1} parent=1 // pred_check_branch
      %35 = sbr.rel (0) target = $region41
    $region40: #{tpu_custom_call.1} parent=1 // pred_region
      _
    $region41: #{tpu_custom_call.1} parent=1 // pred_fallthru
      _
    %v37 = vld [vmem:[%s0] sm:$0xff]
    %v38 = vld [vmem:[%s0 + $0x8] sm:$0xff]
    %v39 = vld [vmem:[%s0 + $0x10] sm:$0xff]
    %v40 = vld [vmem:[%s0 + $0x18] sm:$0xff]
    %v41 = vld [vmem:[%s0 + $0x20] sm:$0xff]
    %v42 = vld [vmem:[%s0 + $0x28] sm:$0xff]
    %v43 = vld [vmem:[%s0 + $0x30] sm:$0xff]
    %v44 = vld [vmem:[%s0 + $0x38] sm:$0xff]
    %v45 = vpack.c.bf16 %v38, %v37
    %v46 = vpack.c.bf16 %v40, %v39
    %v47 = vpack.c.bf16 %v42, %v41
    %v48 = vpack.c.bf16 %v44, %v43
    %v49 = vld [vmem:[%s1] sm:$0xf]
    %v50 = vld [vmem:[%s1 + $0x4] sm:$0xf]
    %v51 = vld [vmem:[%s1 + $0x8] sm:$0xf]
    %v52 = vld [vmem:[%s1 + $0xc] sm:$0xf]
    %v53 = vld [vmem:[%s1 + $0x10] sm:$0xf]
    %v54 = vld [vmem:[%s1 + $0x14] sm:$0xf]
    %v55 = vld [vmem:[%s1 + $0x18] sm:$0xf]
    %v56 = vld [vmem:[%s1 + $0x1c] sm:$0xf]
    %v57 = vld [vmem:[%s1 + $0x20] sm:$0xf]
    %v58 = vld [vmem:[%s1 + $0x24] sm:$0xf]
    %v59 = vld [vmem:[%s1 + $0x28] sm:$0xf]
    %v60 = vld [vmem:[%s1 + $0x2c] sm:$0xf]
    %v61 = vld [vmem:[%s1 + $0x30] sm:$0xf]
    %v62 = vld [vmem:[%s1 + $0x34] sm:$0xf]
    %v63 = vld [vmem:[%s1 + $0x38] sm:$0xf]
    %v64 = vld [vmem:[%s1 + $0x3c] sm:$0xf]
    %v81 = vunpack.c.l.b16 %v49
    %v82 = vunpack.c.l.b16 %v50
    %v83 = vunpack.c.l.b16 %v51
    %v84 = vunpack.c.l.b16 %v52
    %v85 = vunpack.c.l.b16 %v53
    %v86 = vunpack.c.l.b16 %v54
    %v87 = vunpack.c.l.b16 %v55
    %v88 = vunpack.c.l.b16 %v56
    %v89 = vunpack.c.l.b16 %v57
    %v90 = vunpack.c.l.b16 %v58
    %v91 = vunpack.c.l.b16 %v59
    %v92 = vunpack.c.l.b16 %v60
    %v93 = vunpack.c.l.b16 %v61
    %v94 = vunpack.c.l.b16 %v62
    %v95 = vunpack.c.l.b16 %v63
    %v96 = vunpack.c.l.b16 %v64
    %v97 = vpack.c.b16 %v82, %v81
    %v98 = vpack.c.b16 %v84, %v83
    %v99 = vpack.c.b16 %v86, %v85
    %v100 = vpack.c.b16 %v88, %v87
    %v101 = vpack.c.b16 %v90, %v89
    %v102 = vpack.c.b16 %v92, %v91
    %v103 = vpack.c.b16 %v94, %v93
    %v104 = vpack.c.b16 %v96, %v95
    %113 = vmatprep.subr.bf16.mxu0 0
    %114 = vmatpush1.bf16.msra.mxu0 %v97
    %115 = vmatprep.subr.bf16.mxu0 0
    %116 = vmatpush1.bf16.msra.mxu0 %v98
    %117 = vmatprep.subr.bf16.mxu0 0
    %118 = vmatpush1.bf16.msra.mxu0 %v99
    %119 = vmatprep.subr.bf16.mxu0 0
    %120 = vmatpush1.bf16.msra.mxu0 %v100
    %121 = vmatprep.subr.bf16.mxu0 0
    %122 = vmatpush1.bf16.msra.mxu0 %v101
    %123 = vmatprep.subr.bf16.mxu0 0
    %124 = vmatpush1.bf16.msra.mxu0 %v102
    %125 = vmatprep.subr.bf16.mxu0 0
    %126 = vmatpush1.bf16.msra.mxu0 %v103
    %127 = vmatprep.subr.bf16.mxu0 0
    %128 = vmatpush1.bf16.msra.mxu0 %v104
    %129 = vmatprep.subr.bf16.mxu0 0
    %130 = vmatpush1.bf16.msra.mxu0 0
    %131 = vmatprep.subr.bf16.mxu0 0
    %132 = vmatpush1.bf16.msra.mxu0 0
    %133 = vmatprep.subr.bf16.mxu0 0
    %134 = vmatpush1.bf16.msra.mxu0 0
    %135 = vmatprep.subr.bf16.mxu0 0
    %136 = vmatpush1.bf16.msra.mxu0 0
    %137 = vmatprep.subr.bf16.mxu0 0
    %138 = vmatpush1.bf16.msra.mxu0 0
    %139 = vmatprep.subr.bf16.mxu0 0
    %140 = vmatpush1.bf16.msra.mxu0 0
    %141 = vmatprep.subr.bf16.mxu0 0
    %142 = vmatpush1.bf16.msra.mxu0 0
    %143 = vmatprep.subr.bf16.mxu0 0
    %144 = vmatpush1.bf16.msra.mxu0 0
    %145 = vmatprep.mubr.bf16.mxu0 0
    %146 = vmatmul.mubr.bf16.gmra.mrb[0].mxu0 %v45
    %v147 = vpop.f32.mrb[0].mxu0
    %v148 = vadd.f32 0.0, %v147
    %v149 = vpop.f32.mrb[0].mxu0
    %v150 = vpop.f32.mrb[0].mxu0
    %v151 = vadd.f32 0.0, %v150
    %v152 = vpop.f32.mrb[0].mxu0
    %153 = vmatprep.mubr.bf16.mxu0 0
    %154 = vmatmul.mubr.bf16.gmra.mrb[0].mxu0 %v46
    %v155 = vpop.f32.mrb[0].mxu0
    %v156 = vadd.f32 0.0, %v155
    %v157 = vpop.f32.mrb[0].mxu0
    %v158 = vpop.f32.mrb[0].mxu0
    %v159 = vadd.f32 0.0, %v158
    %v160 = vpop.f32.mrb[0].mxu0
    %161 = vmatprep.mubr.bf16.mxu0 0
    %162 = vmatmul.mubr.bf16.gmra.mrb[0].mxu0 %v47
    %v163 = vpop.f32.mrb[0].mxu0
    %v164 = vadd.f32 0.0, %v163
    %v165 = vpop.f32.mrb[0].mxu0
    %v166 = vpop.f32.mrb[0].mxu0
    %v167 = vadd.f32 0.0, %v166
    %v168 = vpop.f32.mrb[0].mxu0
    %169 = vmatprep.mubr.bf16.mxu0 0
    %170 = vmatmul.mubr.bf16.gmra.mrb[0].mxu0 %v48
    %v171 = vpop.f32.mrb[0].mxu0
    %v172 = vadd.f32 0.0, %v171
    %v173 = vpop.f32.mrb[0].mxu0
    %v174 = vpop.f32.mrb[0].mxu0
    %v175 = vadd.f32 0.0, %v174
    %v176 = vpop.f32.mrb[0].mxu0
    %177 = vdwg.mxu0
    %v178 = vld [vmem:[%s2] sm:$0xf]
    %v179 = vld [vmem:[%s2 + $0x4] sm:$0xf]
    %v180 = vld [vmem:[%s2 + $0x8] sm:$0xf]
    %v181 = vld [vmem:[%s2 + $0xc] sm:$0xf]
    %v182 = vld [vmem:[%s2 + $0x10] sm:$0xf]
    %v183 = vld [vmem:[%s2 + $0x14] sm:$0xf]
    %v184 = vld [vmem:[%s2 + $0x18] sm:$0xf]
    %v185 = vld [vmem:[%s2 + $0x1c] sm:$0xf]
    %v186 = vld [vmem:[%s2 + $0x20] sm:$0xf]
    %v187 = vld [vmem:[%s2 + $0x24] sm:$0xf]
    %v188 = vld [vmem:[%s2 + $0x28] sm:$0xf]
    %v189 = vld [vmem:[%s2 + $0x2c] sm:$0xf]
    %v190 = vld [vmem:[%s2 + $0x30] sm:$0xf]
    %v191 = vld [vmem:[%s2 + $0x34] sm:$0xf]
    %v192 = vld [vmem:[%s2 + $0x38] sm:$0xf]
    %v193 = vld [vmem:[%s2 + $0x3c] sm:$0xf]
    %v210 = vunpack.c.l.b16 %v178
    %v211 = vunpack.c.l.b16 %v179
    %v212 = vunpack.c.l.b16 %v180
    %v213 = vunpack.c.l.b16 %v181
    %v214 = vunpack.c.l.b16 %v182
    %v215 = vunpack.c.l.b16 %v183
    %v216 = vunpack.c.l.b16 %v184
    %v217 = vunpack.c.l.b16 %v185
    %v218 = vunpack.c.l.b16 %v186
    %v219 = vunpack.c.l.b16 %v187
    %v220 = vunpack.c.l.b16 %v188
    %v221 = vunpack.c.l.b16 %v189
    %v222 = vunpack.c.l.b16 %v190
    %v223 = vunpack.c.l.b16 %v191
    %v224 = vunpack.c.l.b16 %v192
    %v225 = vunpack.c.l.b16 %v193
    %v226 = vpack.c.b16 %v211, %v210
    %v227 = vpack.c.b16 %v213, %v212
    %v228 = vpack.c.b16 %v215, %v214
    %v229 = vpack.c.b16 %v217, %v216
    %v230 = vpack.c.b16 %v219, %v218
    %v231 = vpack.c.b16 %v221, %v220
    %v232 = vpack.c.b16 %v223, %v222
    %v233 = vpack.c.b16 %v225, %v224
    %242 = vmatprep.subr.bf16.mxu0 0
    %243 = vmatpush1.bf16.msra.mxu0 %v226
    %244 = vmatprep.subr.bf16.mxu0 0
    %245 = vmatpush1.bf16.msra.mxu0 %v227
    %246 = vmatprep.subr.bf16.mxu0 0
    %247 = vmatpush1.bf16.msra.mxu0 %v228
    %248 = vmatprep.subr.bf16.mxu0 0
    %249 = vmatpush1.bf16.msra.mxu0 %v229
    %250 = vmatprep.subr.bf16.mxu0 0
    %251 = vmatpush1.bf16.msra.mxu0 %v230
    %252 = vmatprep.subr.bf16.mxu0 0
    %253 = vmatpush1.bf16.msra.mxu0 %v231
    %254 = vmatprep.subr.bf16.mxu0 0
    %255 = vmatpush1.bf16.msra.mxu0 %v232
    %256 = vmatprep.subr.bf16.mxu0 0
    %257 = vmatpush1.bf16.msra.mxu0 %v233
    %258 = vmatprep.subr.bf16.mxu0 0
    %259 = vmatpush1.bf16.msra.mxu0 0
    %260 = vmatprep.subr.bf16.mxu0 0
    %261 = vmatpush1.bf16.msra.mxu0 0
    %262 = vmatprep.subr.bf16.mxu0 0
    %263 = vmatpush1.bf16.msra.mxu0 0
    %264 = vmatprep.subr.bf16.mxu0 0
    %265 = vmatpush1.bf16.msra.mxu0 0
    %266 = vmatprep.subr.bf16.mxu0 0
    %267 = vmatpush1.bf16.msra.mxu0 0
    %268 = vmatprep.subr.bf16.mxu0 0
    %269 = vmatpush1.bf16.msra.mxu0 0
    %270 = vmatprep.subr.bf16.mxu0 0
    %271 = vmatpush1.bf16.msra.mxu0 0
    %272 = vmatprep.subr.bf16.mxu0 0
    %273 = vmatpush1.bf16.msra.mxu0 0
    %274 = vmatprep.mubr.bf16.mxu0 0
    %275 = vmatmul.mubr.bf16.gmra.mrb[0].mxu0 %v45
    %v276 = vpop.f32.mrb[0].mxu0
    %v277 = vadd.f32 0.0, %v276
    %v278 = vpop.f32.mrb[0].mxu0
    %v279 = vpop.f32.mrb[0].mxu0
    %v280 = vadd.f32 0.0, %v279
    %v281 = vpop.f32.mrb[0].mxu0
    %282 = vmatprep.mubr.bf16.mxu0 0
    %283 = vmatmul.mubr.bf16.gmra.mrb[0].mxu0 %v46
    %v284 = vpop.f32.mrb[0].mxu0
    %v285 = vadd.f32 0.0, %v284
    %v286 = vpop.f32.mrb[0].mxu0
    %v287 = vpop.f32.mrb[0].mxu0
    %v288 = vadd.f32 0.0, %v287
    %v289 = vpop.f32.mrb[0].mxu0
    %290 = vmatprep.mubr.bf16.mxu0 0
    %291 = vmatmul.mubr.bf16.gmra.mrb[0].mxu0 %v47
    %v292 = vpop.f32.mrb[0].mxu0
    %v293 = vadd.f32 0.0, %v292
    %v294 = vpop.f32.mrb[0].mxu0
    %v295 = vpop.f32.mrb[0].mxu0
    %v296 = vadd.f32 0.0, %v295
    %v297 = vpop.f32.mrb[0].mxu0
    %298 = vmatprep.mubr.bf16.mxu0 0
    %299 = vmatmul.mubr.bf16.gmra.mrb[0].mxu0 %v48
    %v300 = vpop.f32.mrb[0].mxu0
    %v301 = vadd.f32 0.0, %v300
    %v302 = vpop.f32.mrb[0].mxu0
    %v303 = vpop.f32.mrb[0].mxu0
    %v304 = vadd.f32 0.0, %v303
    %v305 = vpop.f32.mrb[0].mxu0
    %306 = vdwg.mxu0
    %v307 = vlaneseq
    %v308 = vshrl.u32 %v307, 7
    %v309 = vadd.s32 %v308, 8
    %v310 = vadd.s32 %v308, 16
    %v311 = vadd.s32 %v308, 24
    %v312 = vadd.s32 %v308, 32
    %v313 = vadd.s32 %v308, 40
    %v314 = vadd.s32 %v308, 48
    %v315 = vadd.s32 %v308, 56
    %vm316 = vcmp.lt.s32.totalorder %v308, 8
    %vm317 = vcmp.lt.s32.totalorder %v309, 8
    %vm318 = vcmp.lt.s32.totalorder %v310, 8
    %vm319 = vcmp.lt.s32.totalorder %v311, 8
    %vm320 = vcmp.lt.s32.totalorder %v312, 8
    %vm321 = vcmp.lt.s32.totalorder %v313, 8
    %vm322 = vcmp.lt.s32.totalorder %v314, 8
    %vm323 = vcmp.lt.s32.totalorder %v315, 8
    %v324 = vsel %vm316, 1, 0
    %v325 = vsel %vm317, 1, 0
    %v326 = vsel %vm318, 1, 0
    %v327 = vsel %vm319, 1, 0
    %v328 = vsel %vm320, 1, 0
    %v329 = vsel %vm321, 1, 0
    %v330 = vsel %vm322, 1, 0
    %v331 = vsel %vm323, 1, 0
    %vm332 = vcmp.eq.s32.totalorder %v324, 1
    %vm333 = vcmp.eq.s32.totalorder %v325, 1
    %vm334 = vcmp.eq.s32.totalorder %v326, 1
    %vm335 = vcmp.eq.s32.totalorder %v327, 1
    %vm336 = vcmp.eq.s32.totalorder %v328, 1
    %vm337 = vcmp.eq.s32.totalorder %v329, 1
    %vm338 = vcmp.eq.s32.totalorder %v330, 1
    %vm339 = vcmp.eq.s32.totalorder %v331, 1
    %v340 = vsel %vm332, 0.0, %v175
    %v341 = vsel %vm333, 0.0, %v148
    %v342 = vsel %vm334, 0.0, %v151
    %v343 = vsel %vm335, 0.0, %v156
    %v344 = vsel %vm336, 0.0, %v159
    %v345 = vsel %vm337, 0.0, %v164
    %v346 = vsel %vm338, 0.0, %v167
    %v347 = vsel %vm339, 0.0, %v172
    %vm348 = vcmp.ge.s32.totalorder %v308, 56
    %vm349 = vcmp.ge.s32.totalorder %v309, 56
    %vm350 = vcmp.ge.s32.totalorder %v310, 56
    %vm351 = vcmp.ge.s32.totalorder %v311, 56
    %vm352 = vcmp.ge.s32.totalorder %v312, 56
    %vm353 = vcmp.ge.s32.totalorder %v313, 56
    %vm354 = vcmp.ge.s32.totalorder %v314, 56
    %vm355 = vcmp.ge.s32.totalorder %v315, 56
    %v356 = vsel %vm348, 1, 0
    %v357 = vsel %vm349, 1, 0
    %v358 = vsel %vm350, 1, 0
    %v359 = vsel %vm351, 1, 0
    %v360 = vsel %vm352, 1, 0
    %v361 = vsel %vm353, 1, 0
    %v362 = vsel %vm354, 1, 0
    %v363 = vsel %vm355, 1, 0
    %vm364 = vcmp.eq.s32.totalorder %v356, 1
    %vm365 = vcmp.eq.s32.totalorder %v357, 1
    %vm366 = vcmp.eq.s32.totalorder %v358, 1
    %vm367 = vcmp.eq.s32.totalorder %v359, 1
    %vm368 = vcmp.eq.s32.totalorder %v360, 1
    %vm369 = vcmp.eq.s32.totalorder %v361, 1
    %vm370 = vcmp.eq.s32.totalorder %v362, 1
    %vm371 = vcmp.eq.s32.totalorder %v363, 1
    %v372 = vsel %vm364, 0.0, %v151
    %v373 = vsel %vm365, 0.0, %v156
    %v374 = vsel %vm366, 0.0, %v159
    %v375 = vsel %vm367, 0.0, %v164
    %v376 = vsel %vm368, 0.0, %v167
    %v377 = vsel %vm369, 0.0, %v172
    %v378 = vsel %vm370, 0.0, %v175
    %v379 = vsel %vm371, 0.0, %v148
    %v380 = vld [vmem:[%s3] sm:$0x1]
    %v381 = vlaneseq
    %v382 = vshrl.u32 %v381, 7
    %v383 = vsub.s32 0, %v382
    %v384 = vrot.slane %v380, %v383
    %v385 = vmul.f32 %v340, %v384
    %v386 = vmul.f32 %v341, %v384
    %v387 = vmul.f32 %v342, %v384
    %v388 = vmul.f32 %v343, %v384
    %v389 = vmul.f32 %v344, %v384
    %v390 = vmul.f32 %v345, %v384
    %v391 = vmul.f32 %v346, %v384
    %v392 = vmul.f32 %v347, %v384
    %v393 = vld [vmem:[%s3 + $0x1] sm:$0x1]
    %v394 = vlaneseq
    %v395 = vshrl.u32 %v394, 7
    %v396 = vsub.s32 0, %v395
    %v397 = vrot.slane %v393, %v396
    %v398 = vmul.f32 %v148, %v397
    %v399 = vmul.f32 %v151, %v397
    %v400 = vmul.f32 %v156, %v397
    %v401 = vmul.f32 %v159, %v397
    %v402 = vmul.f32 %v164, %v397
    %v403 = vmul.f32 %v167, %v397
    %v404 = vmul.f32 %v172, %v397
    %v405 = vmul.f32 %v175, %v397
    %v406 = vadd.f32 %v385, %v398
    %v407 = vadd.f32 %v386, %v399
    %v408 = vadd.f32 %v387, %v400
    %v409 = vadd.f32 %v388, %v401
    %v410 = vadd.f32 %v389, %v402
    %v411 = vadd.f32 %v390, %v403
    %v412 = vadd.f32 %v391, %v404
    %v413 = vadd.f32 %v392, %v405
    %v414 = vld [vmem:[%s3 + $0x2] sm:$0x1]
    %v415 = vlaneseq
    %v416 = vshrl.u32 %v415, 7
    %v417 = vsub.s32 0, %v416
    %v418 = vrot.slane %v414, %v417
    %v419 = vmul.f32 %v372, %v418
    %v420 = vmul.f32 %v373, %v418
    %v421 = vmul.f32 %v374, %v418
    %v422 = vmul.f32 %v375, %v418
    %v423 = vmul.f32 %v376, %v418
    %v424 = vmul.f32 %v377, %v418
    %v425 = vmul.f32 %v378, %v418
    %v426 = vmul.f32 %v379, %v418
    %v427 = vadd.f32 %v406, %v419
    %v428 = vadd.f32 %v407, %v420
    %v429 = vadd.f32 %v408, %v421
    %v430 = vadd.f32 %v409, %v422
    %v431 = vadd.f32 %v410, %v423
    %v432 = vadd.f32 %v411, %v424
    %v433 = vadd.f32 %v412, %v425
    %v434 = vadd.f32 %v413, %v426
    %v435 = vld [vmem:[%s4] sm:$0x1]
    %v437 = vlaneseq
    %v438 = vshrl.u32 %v437, 7
    %v439 = vsub.s32 0, %v438
    %v440 = vrot.slane %v435, %v439
    %v442 = vadd.f32 %v427, %v440
    %v443 = vadd.f32 %v428, %v440
    %v444 = vadd.f32 %v429, %v440
    %v445 = vadd.f32 %v430, %v440
    %v446 = vadd.f32 %v431, %v440
    %v447 = vadd.f32 %v432, %v440
    %v448 = vadd.f32 %v433, %v440
    %v449 = vadd.f32 %v434, %v440
    %v450 = vxor.u32 %v442, 2147483648
    %v451 = vxor.u32 %v443, 2147483648
    %v452 = vxor.u32 %v444, 2147483648
    %v453 = vxor.u32 %v445, 2147483648
    %v454 = vxor.u32 %v446, 2147483648
    %v455 = vxor.u32 %v447, 2147483648
    %v456 = vxor.u32 %v448, 2147483648
    %v457 = vxor.u32 %v449, 2147483648
    %v458 = vmul.f32 %v450, 1.442695
    %v459 = vpow.pop %v458
    %v460 = vmul.f32 %v451, 1.442695
    %v461 = vpow.pop %v460
    %v462 = vmul.f32 %v452, 1.442695
    %v463 = vpow.pop %v462
    %v464 = vmul.f32 %v453, 1.442695
    %v465 = vpow.pop %v464
    %v466 = vmul.f32 %v454, 1.442695
    %v467 = vpow.pop %v466
    %v468 = vmul.f32 %v455, 1.442695
    %v469 = vpow.pop %v468
    %v470 = vmul.f32 %v456, 1.442695
    %v471 = vpow.pop %v470
    %v472 = vmul.f32 %v457, 1.442695
    %v473 = vpow.pop %v472
    %v474 = vadd.f32 %v459, 1.0
    %v475 = vadd.f32 %v461, 1.0
    %v476 = vadd.f32 %v463, 1.0
    %v477 = vadd.f32 %v465, 1.0
    %v478 = vadd.f32 %v467, 1.0
    %v479 = vadd.f32 %v469, 1.0
    %v480 = vadd.f32 %v471, 1.0
    %v481 = vadd.f32 %v473, 1.0
    %v482 = vrcp.pop %v474
    %v483 = vmul.f32 1.0, %v482
    %v484 = vrcp.pop %v475
    %v485 = vmul.f32 1.0, %v484
    %v486 = vrcp.pop %v476
    %v487 = vmul.f32 1.0, %v486
    %v488 = vrcp.pop %v477
    %v489 = vmul.f32 1.0, %v488
    %v490 = vrcp.pop %v478
    %v491 = vmul.f32 1.0, %v490
    %v492 = vrcp.pop %v479
    %v493 = vmul.f32 1.0, %v492
    %v494 = vrcp.pop %v480
    %v495 = vmul.f32 1.0, %v494
    %v496 = vrcp.pop %v481
    %v497 = vmul.f32 1.0, %v496
    %v498 = vmul.f32 %v442, %v483
    %v499 = vmul.f32 %v443, %v485
    %v500 = vmul.f32 %v444, %v487
    %v501 = vmul.f32 %v445, %v489
    %v502 = vmul.f32 %v446, %v491
    %v503 = vmul.f32 %v447, %v493
    %v504 = vmul.f32 %v448, %v495
    %v505 = vmul.f32 %v449, %v497
    %v506 = vpack.c.bf16 %v499, %v498
    %v507 = vpack.c.bf16 %v501, %v500
    %v508 = vpack.c.bf16 %v503, %v502
    %v509 = vpack.c.bf16 %v505, %v504
    %v510 = vld [vmem:[%s5] sm:$0xf]
    %v511 = vld [vmem:[%s5 + $0x4] sm:$0xf]
    %v512 = vld [vmem:[%s5 + $0x8] sm:$0xf]
    %v513 = vld [vmem:[%s5 + $0xc] sm:$0xf]
    %v514 = vld [vmem:[%s5 + $0x10] sm:$0xf]
    %v515 = vld [vmem:[%s5 + $0x14] sm:$0xf]
    %v516 = vld [vmem:[%s5 + $0x18] sm:$0xf]
    %v517 = vld [vmem:[%s5 + $0x1c] sm:$0xf]
    %v526 = vunpack.c.l.b16 %v510
    %v527 = vunpack.c.l.b16 %v511
    %v528 = vunpack.c.l.b16 %v512
    %v529 = vunpack.c.l.b16 %v513
    %v530 = vunpack.c.l.b16 %v514
    %v531 = vunpack.c.l.b16 %v515
    %v532 = vunpack.c.l.b16 %v516
    %v533 = vunpack.c.l.b16 %v517
    %v534 = vpack.c.b16 %v527, %v526
    %v535 = vpack.c.b16 %v529, %v528
    %v536 = vpack.c.b16 %v531, %v530
    %v537 = vpack.c.b16 %v533, %v532
    %vm542 = vcmask 523264
    %v544 = vsel %vm542, %v506, 0
    %v547 = vsel %vm542, %v507, 0
    %v550 = vsel %vm542, %v508, 0
    %v553 = vsel %vm542, %v509, 0
    %555 = vmatprep.subr.bf16.mxu0 0
    %556 = vmatpush1.bf16.msra.mxu0 %v534
    %557 = vmatprep.subr.bf16.mxu0 0
    %558 = vmatpush1.bf16.msra.mxu0 %v535
    %559 = vmatprep.subr.bf16.mxu0 0
    %560 = vmatpush1.bf16.msra.mxu0 %v536
    %561 = vmatprep.subr.bf16.mxu0 0
    %562 = vmatpush1.bf16.msra.mxu0 %v537
    %563 = vmatprep.subr.bf16.mxu0 0
    %564 = vmatpush1.bf16.msra.mxu0 0
    %565 = vmatprep.subr.bf16.mxu0 0
    %566 = vmatpush1.bf16.msra.mxu0 0
    %567 = vmatprep.subr.bf16.mxu0 0
    %568 = vmatpush1.bf16.msra.mxu0 0
    %569 = vmatprep.subr.bf16.mxu0 0
    %570 = vmatpush1.bf16.msra.mxu0 0
    %571 = vmatprep.subr.bf16.mxu0 0
    %572 = vmatpush1.bf16.msra.mxu0 0
    %573 = vmatprep.subr.bf16.mxu0 0
    %574 = vmatpush1.bf16.msra.mxu0 0
    %575 = vmatprep.subr.bf16.mxu0 0
    %576 = vmatpush1.bf16.msra.mxu0 0
    %577 = vmatprep.subr.bf16.mxu0 0
    %578 = vmatpush1.bf16.msra.mxu0 0
    %579 = vmatprep.subr.bf16.mxu0 0
    %580 = vmatpush1.bf16.msra.mxu0 0
    %581 = vmatprep.subr.bf16.mxu0 0
    %582 = vmatpush1.bf16.msra.mxu0 0
    %583 = vmatprep.subr.bf16.mxu0 0
    %584 = vmatpush1.bf16.msra.mxu0 0
    %585 = vmatprep.subr.bf16.mxu0 0
    %586 = vmatpush1.bf16.msra.mxu0 0
    %587 = vmatprep.mubr.bf16.mxu0 0
    %588 = vmatmul.mubr.bf16.gmra.mrb[0].mxu0 %v544
    %v589 = vpop.f32.mrb[0].mxu0
    %v590 = vadd.f32 0.0, %v589
    %v591 = vpop.f32.mrb[0].mxu0
    %v592 = vpop.f32.mrb[0].mxu0
    %v593 = vadd.f32 0.0, %v592
    %v594 = vpop.f32.mrb[0].mxu0
    %595 = vmatprep.mubr.bf16.mxu0 0
    %596 = vmatmul.mubr.bf16.gmra.mrb[0].mxu0 %v547
    %v597 = vpop.f32.mrb[0].mxu0
    %v598 = vadd.f32 0.0, %v597
    %v599 = vpop.f32.mrb[0].mxu0
    %v600 = vpop.f32.mrb[0].mxu0
    %v601 = vadd.f32 0.0, %v600
    %v602 = vpop.f32.mrb[0].mxu0
    %603 = vmatprep.mubr.bf16.mxu0 0
    %604 = vmatmul.mubr.bf16.gmra.mrb[0].mxu0 %v550
    %v605 = vpop.f32.mrb[0].mxu0
    %v606 = vadd.f32 0.0, %v605
    %v607 = vpop.f32.mrb[0].mxu0
    %v608 = vpop.f32.mrb[0].mxu0
    %v609 = vadd.f32 0.0, %v608
    %v610 = vpop.f32.mrb[0].mxu0
    %611 = vmatprep.mubr.bf16.mxu0 0
    %612 = vmatmul.mubr.bf16.gmra.mrb[0].mxu0 %v553
    %v613 = vpop.f32.mrb[0].mxu0
    %v614 = vadd.f32 0.0, %v613
    %v615 = vpop.f32.mrb[0].mxu0
    %v616 = vpop.f32.mrb[0].mxu0
    %v617 = vadd.f32 0.0, %v616
    %v618 = vpop.f32.mrb[0].mxu0
    %619 = vdwg.mxu0
    %vm620 = vcmask 130048
    %621 = vst.msk [vmem:[#allocation2] sm:$0xff] %vm620, %v590
    %622 = vst.msk [vmem:[#allocation2 + $0x8] sm:$0xff] %vm620, %v593
    %623 = vst.msk [vmem:[#allocation2 + $0x10] sm:$0xff] %vm620, %v598
    %624 = vst.msk [vmem:[#allocation2 + $0x18] sm:$0xff] %vm620, %v601
    %625 = vst.msk [vmem:[#allocation2 + $0x20] sm:$0xff] %vm620, %v606
    %626 = vst.msk [vmem:[#allocation2 + $0x28] sm:$0xff] %vm620, %v609
    %627 = vst.msk [vmem:[#allocation2 + $0x30] sm:$0xff] %vm620, %v614
    %628 = vst.msk [vmem:[#allocation2 + $0x38] sm:$0xff] %vm620, %v617
    %v629 = vld [vmem:[%s6] sm:$0xf]
    %v630 = vld [vmem:[%s6 + $0x4] sm:$0xf]
    %v631 = vld [vmem:[%s6 + $0x8] sm:$0xf]
    %v632 = vld [vmem:[%s6 + $0xc] sm:$0xf]
    %v633 = vld [vmem:[%s6 + $0x10] sm:$0xf]
    %v634 = vld [vmem:[%s6 + $0x14] sm:$0xf]
    %v635 = vld [vmem:[%s6 + $0x18] sm:$0xf]
    %v636 = vld [vmem:[%s6 + $0x1c] sm:$0xf]
    %v645 = vunpack.c.l.b16 %v629
    %v646 = vunpack.c.l.b16 %v630
    %v647 = vunpack.c.l.b16 %v631
    %v648 = vunpack.c.l.b16 %v632
    %v649 = vunpack.c.l.b16 %v633
    %v650 = vunpack.c.l.b16 %v634
    %v651 = vunpack.c.l.b16 %v635
    %v652 = vunpack.c.l.b16 %v636
    %v653 = vpack.c.b16 %v646, %v645
    %v654 = vpack.c.b16 %v648, %v647
    %v655 = vpack.c.b16 %v650, %v649
    %v656 = vpack.c.b16 %v652, %v651
    %661 = vmatprep.subr.bf16.mxu0 0
    %662 = vmatpush1.bf16.msra.mxu0 %v653
    %663 = vmatprep.subr.bf16.mxu0 0
    %664 = vmatpush1.bf16.msra.mxu0 %v654
    %665 = vmatprep.subr.bf16.mxu0 0
    %666 = vmatpush1.bf16.msra.mxu0 %v655
    %667 = vmatprep.subr.bf16.mxu0 0
    %668 = vmatpush1.bf16.msra.mxu0 %v656
    %669 = vmatprep.subr.bf16.mxu0 0
    %670 = vmatpush1.bf16.msra.mxu0 0
    %671 = vmatprep.subr.bf16.mxu0 0
    %672 = vmatpush1.bf16.msra.mxu0 0
    %673 = vmatprep.subr.bf16.mxu0 0
    %674 = vmatpush1.bf16.msra.mxu0 0
    %675 = vmatprep.subr.bf16.mxu0 0
    %676 = vmatpush1.bf16.msra.mxu0 0
    %677 = vmatprep.subr.bf16.mxu0 0
    %678 = vmatpush1.bf16.msra.mxu0 0
    %679 = vmatprep.subr.bf16.mxu0 0
    %680 = vmatpush1.bf16.msra.mxu0 0
    %681 = vmatprep.subr.bf16.mxu0 0
    %682 = vmatpush1.bf16.msra.mxu0 0
    %683 = vmatprep.subr.bf16.mxu0 0
    %684 = vmatpush1.bf16.msra.mxu0 0
    %685 = vmatprep.subr.bf16.mxu0 0
    %686 = vmatpush1.bf16.msra.mxu0 0
    %687 = vmatprep.subr.bf16.mxu0 0
    %688 = vmatpush1.bf16.msra.mxu0 0
    %689 = vmatprep.subr.bf16.mxu0 0
    %690 = vmatpush1.bf16.msra.mxu0 0
    %691 = vmatprep.subr.bf16.mxu0 0
    %692 = vmatpush1.bf16.msra.mxu0 0
    %693 = vmatprep.mubr.bf16.mxu0 0
    %694 = vmatmul.mubr.bf16.gmra.mrb[0].mxu0 %v544
    %v695 = vpop.f32.mrb[0].mxu0
    %v696 = vadd.f32 0.0, %v695
    %v697 = vpop.f32.mrb[0].mxu0
    %v698 = vpop.f32.mrb[0].mxu0
    %v699 = vadd.f32 0.0, %v698
    %v700 = vpop.f32.mrb[0].mxu0
    %701 = vmatprep.mubr.bf16.mxu0 0
    %702 = vmatmul.mubr.bf16.gmra.mrb[0].mxu0 %v547
    %v703 = vpop.f32.mrb[0].mxu0
    %v704 = vadd.f32 0.0, %v703
    %v705 = vpop.f32.mrb[0].mxu0
    %v706 = vpop.f32.mrb[0].mxu0
    %v707 = vadd.f32 0.0, %v706
    %v708 = vpop.f32.mrb[0].mxu0
    %709 = vmatprep.mubr.bf16.mxu0 0
    %710 = vmatmul.mubr.bf16.gmra.mrb[0].mxu0 %v550
    %v711 = vpop.f32.mrb[0].mxu0
    %v712 = vadd.f32 0.0, %v711
    %v713 = vpop.f32.mrb[0].mxu0
    %v714 = vpop.f32.mrb[0].mxu0
    %v715 = vadd.f32 0.0, %v714
    %v716 = vpop.f32.mrb[0].mxu0
    %717 = vmatprep.mubr.bf16.mxu0 0
    %718 = vmatmul.mubr.bf16.gmra.mrb[0].mxu0 %v553
    %v719 = vpop.f32.mrb[0].mxu0
    %v720 = vadd.f32 0.0, %v719
    %v721 = vpop.f32.mrb[0].mxu0
    %v722 = vpop.f32.mrb[0].mxu0
    %v723 = vadd.f32 0.0, %v722
    %v724 = vpop.f32.mrb[0].mxu0
    %725 = vdwg.mxu0
    %v726 = vld [vmem:[%s7] sm:$0x1]
    %v727 = vmax.f32 %v726, 0.0
    %vm728 = vcmp.ne.f32.partialorder %v726, %v726
    %v729 = vadd.f32 %v726, 0.0
    %v730 = vand.u32 2147483647, %v726
    %v731 = vsub.f32 0.0, %v730
    %v732 = vmul.f32 %v731, 1.442695
    %v733 = vpow.pop %v732
    %v734 = vadd.f32 %v733, 1.0
    %v735 = vlog2.pop %v734
    %v736 = vmul.f32 %v735, 0.6931472
    %v737 = vmul.f32 -0.5, %v733
    %v738 = vadd.f32 %v737, 1.0
    %v739 = vmul.f32 %v738, %v733
    %v740 = vand.u32 2147483647, %v733
    %vm741 = vcmp.lt.f32.partialorder %v740, 0.0004427343
    %v742 = vsel %vm741, %v739, %v736
    %v743 = vadd.f32 %v727, %v742
    %v744 = vsel %vm728, %v729, %v743
    %v745 = vsub.f32 0.0, %v744
    %v746 = vmul.f32 %v745, 1.442695
    %v747 = vpow.pop %v746
    %v749 = vlaneseq
    %v750 = vshrl.u32 %v749, 7
    %v751 = vsub.s32 0, %v750
    %v752 = vrot.slane %v747, %v751
    %v754 = vmul.f32 %v752, 0.0
    %v755 = vld [vmem:[#allocation2] sm:$0xff]
    %v756 = vadd.f32 %v754, %v755
    %757 = vst.msk [vmem:[#allocation3] sm:$0xff] %vm620, %v756
    %v758 = vmul.f32 %v756, %v752
    %s759 = scalar_lea.vmem [#allocation2], 8
    %v760 = vld [vmem:[%s759] sm:$0xff]
    %v761 = vadd.f32 %v758, %v760
    %s762 = scalar_lea.vmem [#allocation3], 8
    %763 = vst.msk [vmem:[%s762] sm:$0xff] %vm620, %v761
    %v764 = vmul.f32 %v761, %v752
    %s765 = scalar_lea.vmem [#allocation2], 16
    %v766 = vld [vmem:[%s765] sm:$0xff]
    %v767 = vadd.f32 %v764, %v766
    %s768 = scalar_lea.vmem [#allocation3], 16
    %769 = vst.msk [vmem:[%s768] sm:$0xff] %vm620, %v767
    %v770 = vmul.f32 %v767, %v752
    %s771 = scalar_lea.vmem [#allocation2], 24
    %v772 = vld [vmem:[%s771] sm:$0xff]
    %v773 = vadd.f32 %v770, %v772
    %s774 = scalar_lea.vmem [#allocation3], 24
    %775 = vst.msk [vmem:[%s774] sm:$0xff] %vm620, %v773
    %v776 = vmul.f32 %v773, %v752
    %s777 = scalar_lea.vmem [#allocation2], 32
    %v778 = vld [vmem:[%s777] sm:$0xff]
    %v779 = vadd.f32 %v776, %v778
    %s780 = scalar_lea.vmem [#allocation3], 32
    %781 = vst.msk [vmem:[%s780] sm:$0xff] %vm620, %v779
    %v782 = vmul.f32 %v779, %v752
    %s783 = scalar_lea.vmem [#allocation2], 40
    %v784 = vld [vmem:[%s783] sm:$0xff]
    %v785 = vadd.f32 %v782, %v784
    %s786 = scalar_lea.vmem [#allocation3], 40
    %787 = vst.msk [vmem:[%s786] sm:$0xff] %vm620, %v785
    %v788 = vmul.f32 %v785, %v752
    %s789 = scalar_lea.vmem [#allocation2], 48
    %v790 = vld [vmem:[%s789] sm:$0xff]
    %v791 = vadd.f32 %v788, %v790
    %s792 = scalar_lea.vmem [#allocation3], 48
    %793 = vst.msk [vmem:[%s792] sm:$0xff] %vm620, %v791
    %v794 = vmul.f32 %v791, %v752
    %s795 = scalar_lea.vmem [#allocation2], 56
    %v796 = vld [vmem:[%s795] sm:$0xff]
    %v797 = vadd.f32 %v794, %v796
    %s798 = scalar_lea.vmem [#allocation3], 56
    %799 = vst.msk [vmem:[%s798] sm:$0xff] %vm620, %v797
    %v800 = vld [vmem:[#allocation3] sm:$0xff]
    %v801 = vld [vmem:[#allocation3 + $0x8] sm:$0xff]
    %v802 = vld [vmem:[#allocation3 + $0x10] sm:$0xff]
    %v803 = vld [vmem:[#allocation3 + $0x18] sm:$0xff]
    %v804 = vld [vmem:[#allocation3 + $0x20] sm:$0xff]
    %v805 = vld [vmem:[#allocation3 + $0x28] sm:$0xff]
    %v806 = vld [vmem:[#allocation3 + $0x30] sm:$0xff]
    %v807 = vld [vmem:[#allocation3 + $0x38] sm:$0xff]
    %v808 = vmul.f32 %v800, %v696
    %v809 = vmul.f32 %v801, %v699
    %v810 = vmul.f32 %v802, %v704
    %v811 = vmul.f32 %v803, %v707
    %v812 = vmul.f32 %v804, %v712
    %v813 = vmul.f32 %v805, %v715
    %v814 = vmul.f32 %v806, %v720
    %v815 = vmul.f32 %v807, %v723
    %v816 = vsel %vm620, %v808, 0.0
    %817 = vadd.xlane.f32.xlu0 %v816
    %v818 = vpop.xlane.xlu0 %817
    %v819 = vsel %vm620, %v809, 0.0
    %820 = vadd.xlane.f32.xlu0 %v819
    %v821 = vpop.xlane.xlu0 %820
    %v822 = vsel %vm620, %v810, 0.0
    %823 = vadd.xlane.f32.xlu0 %v822
    %v824 = vpop.xlane.xlu0 %823
    %v825 = vsel %vm620, %v811, 0.0
    %826 = vadd.xlane.f32.xlu0 %v825
    %v827 = vpop.xlane.xlu0 %826
    %v828 = vsel %vm620, %v812, 0.0
    %829 = vadd.xlane.f32.xlu0 %v828
    %v830 = vpop.xlane.xlu0 %829
    %v831 = vsel %vm620, %v813, 0.0
    %832 = vadd.xlane.f32.xlu0 %v831
    %v833 = vpop.xlane.xlu0 %832
    %v834 = vsel %vm620, %v814, 0.0
    %835 = vadd.xlane.f32.xlu0 %v834
    %v836 = vpop.xlane.xlu0 %835
    %v837 = vsel %vm620, %v815, 0.0
    %838 = vadd.xlane.f32.xlu0 %v837
    %v839 = vpop.xlane.xlu0 %838
    %v840 = vld [vmem:[%s8] sm:$0x1]
    %v842 = vlaneseq
    %v843 = vshrl.u32 %v842, 7
    %v844 = vsub.s32 0, %v843
    %v845 = vrot.slane %v840, %v844
    %v847 = vmul.f32 %v498, %v845
    %v848 = vmul.f32 %v499, %v845
    %v849 = vmul.f32 %v500, %v845
    %v850 = vmul.f32 %v501, %v845
    %v851 = vmul.f32 %v502, %v845
    %v852 = vmul.f32 %v503, %v845
    %v853 = vmul.f32 %v504, %v845
    %v854 = vmul.f32 %v505, %v845
    %v855 = vadd.f32 %v818, %v847
    %v856 = vadd.f32 %v821, %v848
    %v857 = vadd.f32 %v824, %v849
    %v858 = vadd.f32 %v827, %v850
    %v859 = vadd.f32 %v830, %v851
    %v860 = vadd.f32 %v833, %v852
    %v861 = vadd.f32 %v836, %v853
    %v862 = vadd.f32 %v839, %v854
    %v863 = vxor.u32 %v277, 2147483648
    %v864 = vxor.u32 %v280, 2147483648
    %v865 = vxor.u32 %v285, 2147483648
    %v866 = vxor.u32 %v288, 2147483648
    %v867 = vxor.u32 %v293, 2147483648
    %v868 = vxor.u32 %v296, 2147483648
    %v869 = vxor.u32 %v301, 2147483648
    %v870 = vxor.u32 %v304, 2147483648
    %v871 = vmul.f32 %v863, 1.442695
    %v872 = vpow.pop %v871
    %v873 = vmul.f32 %v864, 1.442695
    %v874 = vpow.pop %v873
    %v875 = vmul.f32 %v865, 1.442695
    %v876 = vpow.pop %v875
    %v877 = vmul.f32 %v866, 1.442695
    %v878 = vpow.pop %v877
    %v879 = vmul.f32 %v867, 1.442695
    %v880 = vpow.pop %v879
    %v881 = vmul.f32 %v868, 1.442695
    %v882 = vpow.pop %v881
    %v883 = vmul.f32 %v869, 1.442695
    %v884 = vpow.pop %v883
    %v885 = vmul.f32 %v870, 1.442695
    %v886 = vpow.pop %v885
    %v887 = vadd.f32 %v872, 1.0
    %v888 = vadd.f32 %v874, 1.0
    %v889 = vadd.f32 %v876, 1.0
    %v890 = vadd.f32 %v878, 1.0
    %v891 = vadd.f32 %v880, 1.0
    %v892 = vadd.f32 %v882, 1.0
    %v893 = vadd.f32 %v884, 1.0
    %v894 = vadd.f32 %v886, 1.0
    %v895 = vrcp.pop %v887
    %v896 = vmul.f32 1.0, %v895
    %v897 = vrcp.pop %v888
    %v898 = vmul.f32 1.0, %v897
    %v899 = vrcp.pop %v889
    %v900 = vmul.f32 1.0, %v899
    %v901 = vrcp.pop %v890
    %v902 = vmul.f32 1.0, %v901
    %v903 = vrcp.pop %v891
    %v904 = vmul.f32 1.0, %v903
    %v905 = vrcp.pop %v892
    %v906 = vmul.f32 1.0, %v905
    %v907 = vrcp.pop %v893
    %v908 = vmul.f32 1.0, %v907
    %v909 = vrcp.pop %v894
    %v910 = vmul.f32 1.0, %v909
    %v911 = vmul.f32 %v277, %v896
    %v912 = vmul.f32 %v280, %v898
    %v913 = vmul.f32 %v285, %v900
    %v914 = vmul.f32 %v288, %v902
    %v915 = vmul.f32 %v293, %v904
    %v916 = vmul.f32 %v296, %v906
    %v917 = vmul.f32 %v301, %v908
    %v918 = vmul.f32 %v304, %v910
    %v919 = vmul.f32 %v855, %v911
    %v920 = vmul.f32 %v856, %v912
    %v921 = vmul.f32 %v857, %v913
    %v922 = vmul.f32 %v858, %v914
    %v923 = vmul.f32 %v859, %v915
    %v924 = vmul.f32 %v860, %v916
    %v925 = vmul.f32 %v861, %v917
    %v926 = vmul.f32 %v862, %v918
    %v927 = vpack.c.bf16 %v920, %v919
    %v928 = vpack.c.bf16 %v922, %v921
    %v929 = vpack.c.bf16 %v924, %v923
    %v930 = vpack.c.bf16 %v926, %v925
    %v931 = vld [vmem:[%s9] sm:$0xf]
    %v932 = vld [vmem:[%s9 + $0x4] sm:$0xf]
    %v933 = vld [vmem:[%s9 + $0x8] sm:$0xf]
    %v934 = vld [vmem:[%s9 + $0xc] sm:$0xf]
    %v935 = vld [vmem:[%s9 + $0x10] sm:$0xf]
    %v936 = vld [vmem:[%s9 + $0x14] sm:$0xf]
    %v937 = vld [vmem:[%s9 + $0x18] sm:$0xf]
    %v938 = vld [vmem:[%s9 + $0x1c] sm:$0xf]
    %v947 = vunpack.c.l.b16 %v931
    %v948 = vunpack.c.l.b16 %v932
    %v949 = vunpack.c.l.b16 %v933
    %v950 = vunpack.c.l.b16 %v934
    %v951 = vunpack.c.l.b16 %v935
    %v952 = vunpack.c.l.b16 %v936
    %v953 = vunpack.c.l.b16 %v937
    %v954 = vunpack.c.l.b16 %v938
    %v955 = vpack.c.b16 %v948, %v947
    %v956 = vpack.c.b16 %v950, %v949
    %v957 = vpack.c.b16 %v952, %v951
    %v958 = vpack.c.b16 %v954, %v953
    %v964 = vsel %vm542, %v927, 0
    %v967 = vsel %vm542, %v928, 0
    %v970 = vsel %vm542, %v929, 0
    %v973 = vsel %vm542, %v930, 0
    %975 = vmatprep.subr.bf16.mxu0 0
    %976 = vmatpush1.bf16.msra.mxu0 %v955
    %977 = vmatprep.subr.bf16.mxu0 0
    %978 = vmatpush1.bf16.msra.mxu0 %v956
    %979 = vmatprep.subr.bf16.mxu0 0
    %980 = vmatpush1.bf16.msra.mxu0 %v957
    %981 = vmatprep.subr.bf16.mxu0 0
    %982 = vmatpush1.bf16.msra.mxu0 %v958
    %983 = vmatprep.subr.bf16.mxu0 0
    %984 = vmatpush1.bf16.msra.mxu0 0
    %985 = vmatprep.subr.bf16.mxu0 0
    %986 = vmatpush1.bf16.msra.mxu0 0
    %987 = vmatprep.subr.bf16.mxu0 0
    %988 = vmatpush1.bf16.msra.mxu0 0
    %989 = vmatprep.subr.bf16.mxu0 0
    %990 = vmatpush1.bf16.msra.mxu0 0
    %991 = vmatprep.subr.bf16.mxu0 0
    %992 = vmatpush1.bf16.msra.mxu0 0
    %993 = vmatprep.subr.bf16.mxu0 0
    %994 = vmatpush1.bf16.msra.mxu0 0
    %995 = vmatprep.subr.bf16.mxu0 0
    %996 = vmatpush1.bf16.msra.mxu0 0
    %997 = vmatprep.subr.bf16.mxu0 0
    %998 = vmatpush1.bf16.msra.mxu0 0
    %999 = vmatprep.subr.bf16.mxu0 0
    %1000 = vmatpush1.bf16.msra.mxu0 0
    %1001 = vmatprep.subr.bf16.mxu0 0
    %1002 = vmatpush1.bf16.msra.mxu0 0
    %1003 = vmatprep.subr.bf16.mxu0 0
    %1004 = vmatpush1.bf16.msra.mxu0 0
    %1005 = vmatprep.subr.bf16.mxu0 0
    %1006 = vmatpush1.bf16.msra.mxu0 0
    %1007 = vmatprep.mubr.bf16.mxu0 0
    %1008 = vmatmul.mubr.bf16.gmra.mrb[0].mxu0 %v964
    %v1009 = vpop.f32.mrb[0].mxu0
    %v1010 = vadd.f32 0.0, %v1009
    %v1011 = vpop.f32.mrb[0].mxu0
    %v1012 = vpop.f32.mrb[0].mxu0
    %v1013 = vadd.f32 0.0, %v1012
    %v1014 = vpop.f32.mrb[0].mxu0
    %1015 = vmatprep.mubr.bf16.mxu0 0
    %1016 = vmatmul.mubr.bf16.gmra.mrb[0].mxu0 %v967
    %v1017 = vpop.f32.mrb[0].mxu0
    %v1018 = vadd.f32 0.0, %v1017
    %v1019 = vpop.f32.mrb[0].mxu0
    %v1020 = vpop.f32.mrb[0].mxu0
    %v1021 = vadd.f32 0.0, %v1020
    %v1022 = vpop.f32.mrb[0].mxu0
    %1023 = vmatprep.mubr.bf16.mxu0 0
    %1024 = vmatmul.mubr.bf16.gmra.mrb[0].mxu0 %v970
    %v1025 = vpop.f32.mrb[0].mxu0
    %v1026 = vadd.f32 0.0, %v1025
    %v1027 = vpop.f32.mrb[0].mxu0
    %v1028 = vpop.f32.mrb[0].mxu0
    %v1029 = vadd.f32 0.0, %v1028
    %v1030 = vpop.f32.mrb[0].mxu0
    %1031 = vmatprep.mubr.bf16.mxu0 0
    %1032 = vmatmul.mubr.bf16.gmra.mrb[0].mxu0 %v973
    %v1033 = vpop.f32.mrb[0].mxu0
    %v1034 = vadd.f32 0.0, %v1033
    %v1035 = vpop.f32.mrb[0].mxu0
    %v1036 = vpop.f32.mrb[0].mxu0
    %v1037 = vadd.f32 0.0, %v1036
    %v1038 = vpop.f32.mrb[0].mxu0
    %1039 = vdwg.mxu0
    %1040 = vst [vmem:[#allocation4] sm:$0xff] %v1010
    %1041 = vst [vmem:[#allocation4 + $0x8] sm:$0xff] %v1013
    %1042 = vst [vmem:[#allocation4 + $0x10] sm:$0xff] %v1018
    %1043 = vst [vmem:[#allocation4 + $0x18] sm:$0xff] %v1021
    %1044 = vst [vmem:[#allocation4 + $0x20] sm:$0xff] %v1026
    %1045 = vst [vmem:[#allocation4 + $0x28] sm:$0xff] %v1029
    %1046 = vst [vmem:[#allocation4 + $0x30] sm:$0xff] %v1034
    %1047 = vst [vmem:[#allocation4 + $0x38] sm:$0xff] %v1037
    // Predicated region
    $region42: #{tpu_custom_call.1} parent=1 // pred_check
      _
    $region43: #{tpu_custom_call.1} parent=1 // pred_check_branch
      %1049 = sbr.rel (0) target = $region45
    $region44: #{tpu_custom_call.1} parent=1 // pred_region
      %s1051 = ssub.s32 1024, 1024
      %1052 = vsyncadd [#allocation5], %s1051
      %s1053 = sshll.u32 [#allocation4], 4
      %s1054 = int_to_ptr.vmem [resolvable:$true] %s1053
      %1059 = dma.vmem_to_hbm [thread:$0]  %s1054, 1024, %s10, [#allocation5], 128, 128, 8
    $region45: #{tpu_custom_call.1} parent=1 // pred_fallthru
      _
    // Predicated region
    $region46: #{tpu_custom_call.1} parent=1 // pred_check
      _
    $region47: #{tpu_custom_call.1} parent=1 // pred_check_branch
      %1061 = sbr.rel (0) target = $region49
    $region48: #{tpu_custom_call.1} parent=1 // pred_region
      %1062 = dma.done [#allocation5], 1024
    $region49: #{tpu_custom_call.1} parent=1 // pred_fallthru
      _
    %1063 = vsyncpa [#allocation5], 1

</llo_original>
